<compile_context>
chip_gen: v5e
topology: v5e:2x2
jax: 0.10.0
libtpu: 0.0.40
codegen_flags: <defaults>
</compile_context>

<pallas_src>
import functools

import jax
import jax.numpy as jnp
from jax import lax
from jax.experimental import pallas as pl
from jax.experimental.pallas import tpu as pltpu

EXPANSION = 4


# ----------------------------------------------------------------------------
# Kernel
# ----------------------------------------------------------------------------
def _bottleneck3d_kernel(x_ref, w1m_ref, w1c_ref, w1p_ref, b1_ref,
                         w2m_ref, w2c_ref, w2p_ref, b2_ref,
                         w3_ref, b3_ref, o_ref, *, nb, T, H):
    """One grid step = nb batch elements, M = nb*T*H rows, W folded into lanes.

    x_ref block : (1, M, W*Cin)   f32
    o_ref block : (1, M, W*Cout)  f32 (lane-dense store, W*Cout = 128 here)
    Weights     : per-tap block-diagonal / banded matrices with the BN scale
                  already folded into the columns (bf16 or f32).
    """
    f32 = jnp.float32
    cdt = w1c_ref.dtype                        # matmul operand dtype
    x = x_ref[0]                               # (M, W*Cin) f32
    M, WCin = x.shape
    WP = w1c_ref.shape[1]                      # W * planes

    xb = x.astype(cdt)

    # ---- conv1: (3,1,1) temporal conv + BN1 + ReLU --------------------------
    # One MXU dot per temporal tap, accumulated in f32.  Shifted t+-1 operands
    # are built with small zero halos (no 3x-wide im2col operand).
    xt = xb.reshape(nb, T, H, WCin)
    zt = jnp.zeros((nb, 1, H, WCin), cdt)
    x_tm1 = jnp.concatenate([zt, xt[:, :T - 1]], axis=1).reshape(M, WCin)
    x_tp1 = jnp.concatenate([xt[:, 1:], zt], axis=1).reshape(M, WCin)
    y1 = jnp.dot(xb, w1c_ref[...], preferred_element_type=f32)
    y1 = y1 + jnp.dot(x_tm1, w1m_ref[...], preferred_element_type=f32)
    y1 = y1 + jnp.dot(x_tp1, w1p_ref[...], preferred_element_type=f32)
    y1 = jnp.maximum(y1 + b1_ref[...], 0.0).astype(cdt)   # BN1 scale in weights

    # ---- conv2: (1,3,3) spatial conv + BN2 + ReLU ---------------------------
    # One dot per h tap; the 3 w taps (and W zero padding) are folded into the
    # banded per-tap weight, so no extra lane-dim gymnastics are needed.
    yh = y1.reshape(nb * T, H, WP)
    zh = jnp.zeros((nb * T, 1, WP), cdt)
    y_hm1 = jnp.concatenate([zh, yh[:, :H - 1]], axis=1).reshape(M, WP)
    y_hp1 = jnp.concatenate([yh[:, 1:], zh], axis=1).reshape(M, WP)
    y2 = jnp.dot(y1, w2c_ref[...], preferred_element_type=f32)
    y2 = y2 + jnp.dot(y_hm1, w2m_ref[...], preferred_element_type=f32)
    y2 = y2 + jnp.dot(y_hp1, w2p_ref[...], preferred_element_type=f32)
    y2 = jnp.maximum(y2 + b2_ref[...], 0.0).astype(cdt)   # BN2 scale in weights

    # ---- conv3 (1x1x1) + BN3, identity residual, final ReLU (all f32) ------
    y3 = jnp.dot(y2, w3_ref[...], preferred_element_type=f32) + b3_ref[...]
    o_ref[0] = jnp.maximum(y3 + x, 0.0).astype(o_ref.dtype)


# ----------------------------------------------------------------------------
# Once-per-parameter-set weight folding (hoisted out of the per-call hot path)
# ----------------------------------------------------------------------------
def fold_params(params, W, compute_dtype=jnp.bfloat16):
    """Fold conv weights + BN scales into per-tap matmul weights.

    Returns (w1_m1, w1_c, w1_p1, b1, w2_m1, w2_c, w2_p1, b2, w3, b3) where the
    weights are (lane-folded-W) block-diagonal / banded matrices in
    `compute_dtype` and the biases stay f32.
    """
    w1, s1, b1, w2, s2, b2, w3, s3, b3 = params
    f32 = jnp.float32
    Cin, P = w1.shape[1], w1.shape[2]
    Cout = w3.shape[1]
    eyeW = jnp.eye(W, dtype=f32)

    s1t = jnp.tile(s1, W)                      # (W*P,)  per-output-column scale
    s2t = jnp.tile(s2, W)
    s3t = jnp.tile(s3, W)                      # (W*Cout,)

    # conv1 taps: block diagonal over w (rows=(w,cin), cols=(w,p)).
    w1_taps = [
        (jnp.einsum('cp,uv->ucvp', w1[k], eyeW).reshape(W * Cin, W * P)
         * s1t[None, :]).astype(compute_dtype)
        for k in range(3)
    ]
    # conv2 taps (over kh): banded over w — encodes the 3 kw taps + W zero-pad.
    wi = jnp.arange(W)
    dw = jnp.arange(3)
    band = (wi[:, None, None] - wi[None, :, None]
            == (dw - 1)[None, None, :]).astype(f32)          # (w_in, w_out, kw)
    w2_taps = [
        (jnp.einsum('uve,epq->upvq', band, w2[k]).reshape(W * P, W * P)
         * s2t[None, :]).astype(compute_dtype)
        for k in range(3)
    ]
    # conv3: block diagonal over w.
    w3f = (jnp.einsum('pq,uv->upvq', w3, eyeW).reshape(W * P, W * Cout)
           * s3t[None, :]).astype(compute_dtype)

    b1t = jnp.tile(b1, W).reshape(1, W * P).astype(f32)
    b2t = jnp.tile(b2, W).reshape(1, W * P).astype(f32)
    b3t = jnp.tile(b3, W).reshape(1, W * Cout).astype(f32)
    return (w1_taps[0], w1_taps[1], w1_taps[2], b1t,
            w2_taps[0], w2_taps[1], w2_taps[2], b2t, w3f, b3t)


def _vmem_limit_bytes():
    # v7x has 64 MiB of VMEM per TensorCore (vs 128 MiB on v5e/v6e); cap the
    # scoped limit at half the physical capacity to leave Mosaic headroom.
    try:
        cap = pltpu.get_tpu_info().vmem_capacity_bytes
    except Exception:
        cap = 64 * 1024 * 1024
    return int(min(cap // 2, 32 * 1024 * 1024))


# ----------------------------------------------------------------------------
# Channels-last hot path
# ----------------------------------------------------------------------------
@jax.jit
def bottleneck3d_ndhwc(x, folded):
    """Bottleneck3d forward, channels-last.  x: (N, T, H, W, C), C==planes*4."""
    (w1m, w1c, w1p, b1, w2m, w2c, w2p, b2, w3f, b3) = folded
    N, T, H, W, C = x.shape
    WCin = W * C
    WP = w1c.shape[1]
    WCout = w3f.shape[1]
    assert w1c.shape[0] == WCin, "folded params were built for a different W/C"
    assert WCout == WCin, "identity residual requires inplanes == planes*4"
    # W-folding gate (review): only fold W into lanes while it stays vreg-sized.
    assert WCin <= 512, "W*C too large for lane folding; tile W / keep C on lanes"

    # Rows per grid step: fold batch elements until M = nb*T*H is MXU friendly
    # (>=128 rows), but keep >=2 grid steps so the pipeline can prefetch and
    # both v7x TensorCores get work.
    rows = T * H
    nb = 1
    while nb < N and N % (2 * nb) == 0 and nb * rows < 128:
        nb *= 2
    if nb > 1 and N // nb < 2:
        nb //= 2
    G = N // nb
    M = nb * rows

    x_rows = x.reshape(G, M, WCin)             # contiguous merge, no data move

    # MXU FLOPs actually executed (includes the structural zeros of the folded
    # weights) + real HBM bytes.
    flops = 2 * N * rows * (3 * WCin * WP + 3 * WP * WP + WP * WCout)
    bytes_accessed = (2 * N * rows * WCin) * x.dtype.itemsize
    bytes_accessed += sum(a.size * a.dtype.itemsize for a in folded)

    kernel = functools.partial(_bottleneck3d_kernel, nb=nb, T=T, H=H)
    wspec = lambda a: pl.BlockSpec(a.shape, lambda g: (0, 0))

    out = pl.pallas_call(
        kernel,
        out_shape=jax.ShapeDtypeStruct((G, M, WCout), x.dtype),
        grid_spec=pltpu.PrefetchScalarGridSpec(
            num_scalar_prefetch=0,
            grid=(G,),
            in_specs=[
                pl.BlockSpec((1, M, WCin), lambda g: (g, 0, 0)),
                # Grid-invariant weights/biases (constant index map -> fetched
                # once).  At realistic sizes, single-buffer them with
                # pipeline_mode=pl.Buffered(1) to halve their VMEM footprint.
                wspec(w1m), wspec(w1c), wspec(w1p), wspec(b1),
                wspec(w2m), wspec(w2c), wspec(w2p), wspec(b2),
                wspec(w3f), wspec(b3),
            ],
            out_specs=pl.BlockSpec((1, M, WCout), lambda g: (g, 0, 0)),
        ),
        compiler_params=pltpu.CompilerParams(
            dimension_semantics=("parallel",),
            vmem_limit_bytes=_vmem_limit_bytes()),
        cost_estimate=pl.CostEstimate(flops=flops, transcendentals=0,
                                      bytes_accessed=bytes_accessed),
    )(x_rows, w1m, w1c, w1p, b1, w2m, w2c, w2p, b2, w3f, b3)

    return out.reshape(N, T, H, W, C)


def bottleneck3d(x_ncdhw, folded):
    """NCDHW adapter for parity with the PyTorch module signature.

    The transposes are a one-time model-boundary cost; inside a real network
    keep activations NDHWC and call bottleneck3d_ndhwc directly.
    """
    x = jnp.transpose(x_ncdhw, (0, 2, 3, 4, 1))
    out = bottleneck3d_ndhwc(x, folded)
    return jnp.transpose(out, (0, 4, 1, 2, 3))


# ----------------------------------------------------------------------------
# Synthetic parameters + pure-JAX reference
# ----------------------------------------------------------------------------
def make_params(key, inplanes, planes, eps=1e-5):
    """Deterministic synthetic conv weights + folded (inference) BN params."""
    P = planes
    Cout = planes * EXPANSION
    ks = jax.random.split(key, 15)

    w1 = 0.1 * jax.random.normal(ks[0], (3, inplanes, P), jnp.float32)
    w2 = 0.1 * jax.random.normal(ks[1], (3, 3, P, P), jnp.float32)
    w3 = 0.1 * jax.random.normal(ks[2], (P, Cout), jnp.float32)

    def bn(kg, kb, km, kv, c):
        gamma = 1.0 + 0.1 * jax.random.normal(kg, (c,), jnp.float32)
        beta = 0.1 * jax.random.normal(kb, (c,), jnp.float32)
        mean = 0.1 * jax.random.normal(km, (c,), jnp.float32)
        var = jnp.abs(jax.random.normal(kv, (c,), jnp.float32)) + 0.5
        scale = gamma / jnp.sqrt(var + eps)
        bias = beta - mean * scale
        return scale, bias

    s1, b1 = bn(ks[3], ks[4], ks[5], ks[6], P)
    s2, b2 = bn(ks[7], ks[8], ks[9], ks[10], P)
    s3, b3 = bn(ks[11], ks[12], ks[13], ks[14], Cout)
    return (w1, s1, b1, w2, s2, b2, w3, s3, b3)


def reference_ndhwc(x, params):
    """Pure-JAX (XLA conv) reference of the same forward pass, channels-last."""
    w1, s1, b1, w2, s2, b2, w3, s3, b3 = params
    P = w1.shape[-1]
    Cout = w3.shape[-1]
    dn = ('NDHWC', 'DHWIO', 'NDHWC')

    def cbn(v, w_dhwio, pad, s, b, relu):
        y = lax.conv_general_dilated(v, w_dhwio, (1, 1, 1), pad,
                                     dimension_numbers=dn)
        y = y * s.reshape(1, 1, 1, 1, -1) + b.reshape(1, 1, 1, 1, -1)
        return jnp.maximum(y, 0.0) if relu else y

    y = cbn(x, w1.reshape(3, 1, 1, -1, P),
            [(1, 1), (0, 0), (0, 0)], s1, b1, True)
    y = cbn(y, w2.reshape(1, 3, 3, P, P),
            [(0, 0), (1, 1), (1, 1)], s2, b2, True)
    y = cbn(y, w3.reshape(1, 1, 1, P, Cout),
            [(0, 0), (0, 0), (0, 0)], s3, b3, False)
    return jnp.maximum(y + x, 0.0)


if __name__ == "__main__":
    key = jax.random.PRNGKey(0)
    planes = 4
    inplanes = planes * EXPANSION          # 16: needed for identity residual
    N, T, H, W = 4, 4, 16, 8               # W*Cin = 128 lanes, M = 128 rows/step

    kx, kp = jax.random.split(key)
    x_ncdhw = jax.random.normal(kx, (N, inplanes, T, H, W), jnp.float32)
    params = make_params(kp, inplanes, planes)

    # ---- hoisted once-per-model work (not in the per-call hot path) --------
    x_ndhwc = jnp.transpose(x_ncdhw, (0, 2, 3, 4, 1))   # model-boundary layout
    folded_f32 = fold_params(params, W, jnp.float32)
    folded_bf16 = fold_params(params, W, jnp.bfloat16)  # perf config (v6e/v7x)

    ref = reference_ndhwc(x_ndhwc, params)

    # f32 operand path: exact semantics check.
    out_f32 = jax.block_until_ready(bottleneck3d_ndhwc(x_ndhwc, folded_f32))
    assert out_f32.shape == (N, T, H, W, inplanes)
    err_f32 = float(jnp.max(jnp.abs(out_f32 - ref)))
    assert err_f32 < 1e-3, f"f32 max abs error too large: {err_f32}"

    # bf16 operand path (f32 accumulate/epilogue/residual): looser tolerance
    # for the ~2^-8 operand rounding accumulated over three convs.
    out_bf16 = jax.block_until_ready(bottleneck3d_ndhwc(x_ndhwc, folded_bf16))
    err_bf16 = float(jnp.max(jnp.abs(out_bf16 - ref)))
    assert err_bf16 < 3e-2, f"bf16 max abs error too large: {err_bf16}"

    # NCDHW adapter for parity with the PyTorch module interface.
    out_ncdhw = jax.block_until_ready(bottleneck3d(x_ncdhw, folded_bf16))
    assert out_ncdhw.shape == x_ncdhw.shape

    print("KERNEL_OK")
</pallas_src>

<mosaic_0001>
module attributes {stable_mosaic.version = 11 : i64} {
  func.func @_bottleneck3d_kernel(%arg0: i32, %arg1: memref<1x128x128xf32, #tpu.memory_space<vmem>>, %arg2: memref<128x32xf32, #tpu.memory_space<vmem>>, %arg3: memref<128x32xf32, #tpu.memory_space<vmem>>, %arg4: memref<128x32xf32, #tpu.memory_space<vmem>>, %arg5: memref<1x32xf32, #tpu.memory_space<vmem>>, %arg6: memref<32x32xf32, #tpu.memory_space<vmem>>, %arg7: memref<32x32xf32, #tpu.memory_space<vmem>>, %arg8: memref<32x32xf32, #tpu.memory_space<vmem>>, %arg9: memref<1x32xf32, #tpu.memory_space<vmem>>, %arg10: memref<32x128xf32, #tpu.memory_space<vmem>>, %arg11: memref<1x128xf32, #tpu.memory_space<vmem>>, %arg12: memref<1x128x128xf32, #tpu.memory_space<vmem>>) attributes {dimension_semantics = [#tpu.dimension_semantics<parallel>], iteration_bounds = array<i64: 2>, scalar_prefetch = 0 : i64, scratch_operands = 0 : i64, tpu.core_type = #tpu.core_type<tc>, window_params = [{transform_indices = @transform_0, window_bounds = array<i64: 1, 128, 128>}, {pipeline_mode = #tpu.pipeline_mode<synchronous>, transform_indices = @transform_1, window_bounds = array<i64: 128, 32>}, {pipeline_mode = #tpu.pipeline_mode<synchronous>, transform_indices = @transform_2, window_bounds = array<i64: 128, 32>}, {pipeline_mode = #tpu.pipeline_mode<synchronous>, transform_indices = @transform_3, window_bounds = array<i64: 128, 32>}, {pipeline_mode = #tpu.pipeline_mode<synchronous>, transform_indices = @transform_4, window_bounds = array<i64: 1, 32>}, {pipeline_mode = #tpu.pipeline_mode<synchronous>, transform_indices = @transform_5, window_bounds = array<i64: 32, 32>}, {pipeline_mode = #tpu.pipeline_mode<synchronous>, transform_indices = @transform_6, window_bounds = array<i64: 32, 32>}, {pipeline_mode = #tpu.pipeline_mode<synchronous>, transform_indices = @transform_7, window_bounds = array<i64: 32, 32>}, {pipeline_mode = #tpu.pipeline_mode<synchronous>, transform_indices = @transform_8, window_bounds = array<i64: 1, 32>}, {pipeline_mode = #tpu.pipeline_mode<synchronous>, transform_indices = @transform_9, window_bounds = array<i64: 32, 128>}, {pipeline_mode = #tpu.pipeline_mode<synchronous>, transform_indices = @transform_10, window_bounds = array<i64: 1, 128>}, {transform_indices = @transform_11, window_bounds = array<i64: 1, 128, 128>}]} {
    %c0 = arith.constant 0 : index
    %c0_0 = arith.constant 0 : index
    %c0_1 = arith.constant 0 : index
    %0 = vector.load %arg1[%c0, %c0_0, %c0_1] : memref<1x128x128xf32, #tpu.memory_space<vmem>>, vector<1x128x128xf32>
    %1 = vector.shape_cast %0 : vector<1x128x128xf32> to vector<128x128xf32>
    %2 = vector.shape_cast %1 : vector<128x128xf32> to vector<2x4x16x128xf32>
    %cst = arith.constant 0.000000e+00 : f32
    %3 = vector.broadcast %cst : f32 to vector<2x1x16x128xf32>
    %4 = vector.extract_strided_slice %2 {offsets = [0, 0, 0, 0], sizes = [2, 3, 16, 128], strides = [1, 1, 1, 1]} : vector<2x4x16x128xf32> to vector<2x3x16x128xf32>
    %5 = tpu.concatenate %3, %4 in 1 : vector<2x1x16x128xf32>, vector<2x3x16x128xf32> -> vector<2x4x16x128xf32>
    %6 = vector.shape_cast %5 : vector<2x4x16x128xf32> to vector<128x128xf32>
    %7 = vector.extract_strided_slice %2 {offsets = [0, 1, 0, 0], sizes = [2, 3, 16, 128], strides = [1, 1, 1, 1]} : vector<2x4x16x128xf32> to vector<2x3x16x128xf32>
    %8 = tpu.concatenate %7, %3 in 1 : vector<2x3x16x128xf32>, vector<2x1x16x128xf32> -> vector<2x4x16x128xf32>
    %9 = vector.shape_cast %8 : vector<2x4x16x128xf32> to vector<128x128xf32>
    %c0_2 = arith.constant 0 : index
    %c0_3 = arith.constant 0 : index
    %10 = vector.load %arg3[%c0_2, %c0_3] : memref<128x32xf32, #tpu.memory_space<vmem>>, vector<128x32xf32>
    %cst_4 = arith.constant dense<0.000000e+00> : vector<128x32xf32>
    %11 = tpu.matmul %1, %10, %cst_4 {dimension_numbers = #tpu.dot_dimension_numbers<[1], [0], [0], [1], [0, 0, 1, 1], [], []>} : vector<128x128xf32>, vector<128x32xf32>, vector<128x32xf32> -> vector<128x32xf32>
    %c0_5 = arith.constant 0 : index
    %c0_6 = arith.constant 0 : index
    %12 = vector.load %arg2[%c0_5, %c0_6] : memref<128x32xf32, #tpu.memory_space<vmem>>, vector<128x32xf32>
    %cst_7 = arith.constant dense<0.000000e+00> : vector<128x32xf32>
    %13 = tpu.matmul %6, %12, %cst_7 {dimension_numbers = #tpu.dot_dimension_numbers<[1], [0], [0], [1], [0, 0, 1, 1], [], []>} : vector<128x128xf32>, vector<128x32xf32>, vector<128x32xf32> -> vector<128x32xf32>
    %14 = arith.addf %11, %13 : vector<128x32xf32>
    %c0_8 = arith.constant 0 : index
    %c0_9 = arith.constant 0 : index
    %15 = vector.load %arg4[%c0_8, %c0_9] : memref<128x32xf32, #tpu.memory_space<vmem>>, vector<128x32xf32>
    %cst_10 = arith.constant dense<0.000000e+00> : vector<128x32xf32>
    %16 = tpu.matmul %9, %15, %cst_10 {dimension_numbers = #tpu.dot_dimension_numbers<[1], [0], [0], [1], [0, 0, 1, 1], [], []>} : vector<128x128xf32>, vector<128x32xf32>, vector<128x32xf32> -> vector<128x32xf32>
    %17 = arith.addf %14, %16 : vector<128x32xf32>
    %c0_11 = arith.constant 0 : index
    %c0_12 = arith.constant 0 : index
    %18 = vector.load %arg5[%c0_11, %c0_12] : memref<1x32xf32, #tpu.memory_space<vmem>>, vector<1x32xf32>
    %19 = vector.broadcast %18 : vector<1x32xf32> to vector<128x32xf32>
    %20 = arith.addf %17, %19 : vector<128x32xf32>
    %cst_13 = arith.constant 0.000000e+00 : f32
    %21 = vector.broadcast %cst_13 : f32 to vector<128x32xf32>
    %22 = arith.maximumf %20, %21 : vector<128x32xf32>
    %23 = vector.shape_cast %22 : vector<128x32xf32> to vector<8x16x32xf32>
    %cst_14 = arith.constant 0.000000e+00 : f32
    %24 = vector.broadcast %cst_14 : f32 to vector<8x1x32xf32>
    %25 = vector.extract_strided_slice %23 {offsets = [0, 0, 0], sizes = [8, 15, 32], strides = [1, 1, 1]} : vector<8x16x32xf32> to vector<8x15x32xf32>
    %26 = tpu.concatenate %24, %25 in 1 : vector<8x1x32xf32>, vector<8x15x32xf32> -> vector<8x16x32xf32>
    %27 = vector.shape_cast %26 : vector<8x16x32xf32> to vector<128x32xf32>
    %28 = vector.extract_strided_slice %23 {offsets = [0, 1, 0], sizes = [8, 15, 32], strides = [1, 1, 1]} : vector<8x16x32xf32> to vector<8x15x32xf32>
    %29 = tpu.concatenate %28, %24 in 1 : vector<8x15x32xf32>, vector<8x1x32xf32> -> vector<8x16x32xf32>
    %30 = vector.shape_cast %29 : vector<8x16x32xf32> to vector<128x32xf32>
    %c0_15 = arith.constant 0 : index
    %c0_16 = arith.constant 0 : index
    %31 = vector.load %arg7[%c0_15, %c0_16] : memref<32x32xf32, #tpu.memory_space<vmem>>, vector<32x32xf32>
    %cst_17 = arith.constant dense<0.000000e+00> : vector<128x32xf32>
    %32 = tpu.matmul %22, %31, %cst_17 {dimension_numbers = #tpu.dot_dimension_numbers<[1], [0], [0], [1], [0, 0, 1, 1], [], []>} : vector<128x32xf32>, vector<32x32xf32>, vector<128x32xf32> -> vector<128x32xf32>
    %c0_18 = arith.constant 0 : index
    %c0_19 = arith.constant 0 : index
    %33 = vector.load %arg6[%c0_18, %c0_19] : memref<32x32xf32, #tpu.memory_space<vmem>>, vector<32x32xf32>
    %cst_20 = arith.constant dense<0.000000e+00> : vector<128x32xf32>
    %34 = tpu.matmul %27, %33, %cst_20 {dimension_numbers = #tpu.dot_dimension_numbers<[1], [0], [0], [1], [0, 0, 1, 1], [], []>} : vector<128x32xf32>, vector<32x32xf32>, vector<128x32xf32> -> vector<128x32xf32>
    %35 = arith.addf %32, %34 : vector<128x32xf32>
    %c0_21 = arith.constant 0 : index
    %c0_22 = arith.constant 0 : index
    %36 = vector.load %arg8[%c0_21, %c0_22] : memref<32x32xf32, #tpu.memory_space<vmem>>, vector<32x32xf32>
    %cst_23 = arith.constant dense<0.000000e+00> : vector<128x32xf32>
    %37 = tpu.matmul %30, %36, %cst_23 {dimension_numbers = #tpu.dot_dimension_numbers<[1], [0], [0], [1], [0, 0, 1, 1], [], []>} : vector<128x32xf32>, vector<32x32xf32>, vector<128x32xf32> -> vector<128x32xf32>
    %38 = arith.addf %35, %37 : vector<128x32xf32>
    %c0_24 = arith.constant 0 : index
    %c0_25 = arith.constant 0 : index
    %39 = vector.load %arg9[%c0_24, %c0_25] : memref<1x32xf32, #tpu.memory_space<vmem>>, vector<1x32xf32>
    %40 = vector.broadcast %39 : vector<1x32xf32> to vector<128x32xf32>
    %41 = arith.addf %38, %40 : vector<128x32xf32>
    %cst_26 = arith.constant 0.000000e+00 : f32
    %42 = vector.broadcast %cst_26 : f32 to vector<128x32xf32>
    %43 = arith.maximumf %41, %42 : vector<128x32xf32>
    %c0_27 = arith.constant 0 : index
    %c0_28 = arith.constant 0 : index
    %44 = vector.load %arg10[%c0_27, %c0_28] : memref<32x128xf32, #tpu.memory_space<vmem>>, vector<32x128xf32>
    %cst_29 = arith.constant dense<0.000000e+00> : vector<128x128xf32>
    %45 = tpu.matmul %43, %44, %cst_29 {dimension_numbers = #tpu.dot_dimension_numbers<[1], [0], [0], [1], [0, 0, 1, 1], [], []>} : vector<128x32xf32>, vector<32x128xf32>, vector<128x128xf32> -> vector<128x128xf32>
    %c0_30 = arith.constant 0 : index
    %c0_31 = arith.constant 0 : index
    %46 = vector.load %arg11[%c0_30, %c0_31] : memref<1x128xf32, #tpu.memory_space<vmem>>, vector<1x128xf32>
    %47 = vector.broadcast %46 : vector<1x128xf32> to vector<128x128xf32>
    %48 = arith.addf %45, %47 : vector<128x128xf32>
    %49 = arith.addf %48, %1 : vector<128x128xf32>
    %cst_32 = arith.constant 0.000000e+00 : f32
    %50 = vector.broadcast %cst_32 : f32 to vector<128x128xf32>
    %51 = arith.maximumf %49, %50 : vector<128x128xf32>
    %c0_33 = arith.constant 0 : index
    %c0_34 = arith.constant 0 : index
    %c0_35 = arith.constant 0 : index
    %52 = vector.load %arg12[%c0_33, %c0_34, %c0_35] : memref<1x128x128xf32, #tpu.memory_space<vmem>>, vector<1x128x128xf32>
    %53 = vector.shape_cast %52 : vector<1x128x128xf32> to vector<128x128xf32>
    %54 = vector.shape_cast %51 : vector<128x128xf32> to vector<1x128x128xf32>
    tpu.vector_store %arg12[%c0_33, %c0_34, %c0_35], %54 {strides = array<i32>} : memref<1x128x128xf32, #tpu.memory_space<vmem>>, vector<1x128x128xf32>,
    return
  }
  func.func @transform_0(%arg0: i32) -> (i32, i32, i32) {
    %c0_i32 = arith.constant 0 : i32
    %c0_i32_0 = arith.constant 0 : i32
    %c0_i32_1 = arith.constant 0 : i32
    return %arg0, %c0_i32, %c0_i32_0 : i32, i32, i32
  }
  func.func @transform_1(%arg0: i32) -> (i32, i32) {
    %c0_i32 = arith.constant 0 : i32
    %c0_i32_0 = arith.constant 0 : i32
    %c0_i32_1 = arith.constant 0 : i32
    return %c0_i32, %c0_i32_0 : i32, i32
  }
  func.func @transform_2(%arg0: i32) -> (i32, i32) {
    %c0_i32 = arith.constant 0 : i32
    %c0_i32_0 = arith.constant 0 : i32
    %c0_i32_1 = arith.constant 0 : i32
    return %c0_i32, %c0_i32_0 : i32, i32
  }
  func.func @transform_3(%arg0: i32) -> (i32, i32) {
    %c0_i32 = arith.constant 0 : i32
    %c0_i32_0 = arith.constant 0 : i32
    %c0_i32_1 = arith.constant 0 : i32
    return %c0_i32, %c0_i32_0 : i32, i32
  }
  func.func @transform_4(%arg0: i32) -> (i32, i32) {
    %c0_i32 = arith.constant 0 : i32
    %c0_i32_0 = arith.constant 0 : i32
    %c0_i32_1 = arith.constant 0 : i32
    return %c0_i32, %c0_i32_0 : i32, i32
  }
  func.func @transform_5(%arg0: i32) -> (i32, i32) {
    %c0_i32 = arith.constant 0 : i32
    %c0_i32_0 = arith.constant 0 : i32
    %c0_i32_1 = arith.constant 0 : i32
    return %c0_i32, %c0_i32_0 : i32, i32
  }
  func.func @transform_6(%arg0: i32) -> (i32, i32) {
    %c0_i32 = arith.constant 0 : i32
    %c0_i32_0 = arith.constant 0 : i32
    %c0_i32_1 = arith.constant 0 : i32
    return %c0_i32, %c0_i32_0 : i32, i32
  }
  func.func @transform_7(%arg0: i32) -> (i32, i32) {
    %c0_i32 = arith.constant 0 : i32
    %c0_i32_0 = arith.constant 0 : i32
    %c0_i32_1 = arith.constant 0 : i32
    return %c0_i32, %c0_i32_0 : i32, i32
  }
  func.func @transform_8(%arg0: i32) -> (i32, i32) {
    %c0_i32 = arith.constant 0 : i32
    %c0_i32_0 = arith.constant 0 : i32
    %c0_i32_1 = arith.constant 0 : i32
    return %c0_i32, %c0_i32_0 : i32, i32
  }
  func.func @transform_9(%arg0: i32) -> (i32, i32) {
    %c0_i32 = arith.constant 0 : i32
    %c0_i32_0 = arith.constant 0 : i32
    %c0_i32_1 = arith.constant 0 : i32
    return %c0_i32, %c0_i32_0 : i32, i32
  }
  func.func @transform_10(%arg0: i32) -> (i32, i32) {
    %c0_i32 = arith.constant 0 : i32
    %c0_i32_0 = arith.constant 0 : i32
    %c0_i32_1 = arith.constant 0 : i32
    return %c0_i32, %c0_i32_0 : i32, i32
  }
  func.func @transform_11(%arg0: i32) -> (i32, i32, i32) {
    %c0_i32 = arith.constant 0 : i32
    %c0_i32_0 = arith.constant 0 : i32
    %c0_i32_1 = arith.constant 0 : i32
    return %arg0, %c0_i32, %c0_i32_0 : i32, i32, i32
  }
}

</mosaic_0001>

<llo_original>
// kernel: bottleneck3d_ndhwc.1
$region0: #{bottleneck3d_ndhwc.1}
  #allocation0 [shape = 'u32[]', space=smem, size = 0x4, offset = 0x4, fixed_abs, tag = 'smem constant byte address 0x4 - core index']
  #allocation1 [shape = 'u32[72,128]{1,0:T(1,128)}', space=vmem, size = 0x9000, scoped, tag = 'internal scratch']
  %s0 = inlined_call_operand.vmem [shape: f32[2,128,128], index: 0, kind: input, shape index: {}]
  %s1 = inlined_call_operand.vmem [shape: f32[128,32], index: 1, kind: input, shape index: {}]
  %s2 = inlined_call_operand.vmem [shape: f32[128,32], index: 2, kind: input, shape index: {}]
  %s3 = inlined_call_operand.vmem [shape: f32[128,32], index: 3, kind: input, shape index: {}]
  %s4 = inlined_call_operand.vmem [shape: f32[1,32], index: 4, kind: input, shape index: {}]
  %s5 = inlined_call_operand.vmem [shape: f32[32,32], index: 5, kind: input, shape index: {}]
  %s6 = inlined_call_operand.vmem [shape: f32[32,32], index: 6, kind: input, shape index: {}]
  %s7 = inlined_call_operand.vmem [shape: f32[32,32], index: 7, kind: input, shape index: {}]
  %s8 = inlined_call_operand.vmem [shape: f32[1,32], index: 8, kind: input, shape index: {}]
  %s9 = inlined_call_operand.vmem [shape: f32[32,128], index: 9, kind: input, shape index: {}]
  %s10 = inlined_call_operand.vmem [shape: f32[1,128], index: 10, kind: input, shape index: {}]
  %s11 = inlined_call_operand.vmem [shape: f32[2,128,128], index: 11, kind: output, shape index: {}]
  %s12 = sld [smem:[#allocation0]]
  $region77: #{bottleneck3d_ndhwc.1} parent=0
    _
  %s14 = ssub.s32 1, %s12
  %s15 = scalar_select 0, %s14, %s12
  loop: start=0, step=1, limit=4
  $region2: #{bottleneck3d_ndhwc.1} parent=0 // loop_pre_header
    _
  $region3: #{bottleneck3d_ndhwc.1} parent=0 // loop_header
    %s17 = sphi 0, %s21
    %p18 = scmp.ge.s32.totalorder %s17, 4
    %s27 = sphi 0, %s29
    %s30 = sphi 0, %s27
    %s31 = sphi 0, %s30
    %s47 = sphi 0, %s31
    %s51 = sphi 0, %s51
    %s53 = sphi 0, %s51
    %s54 = sphi 0, %s53
    %s68 = sphi 0, %s54
    %s72 = sphi 0, %s72
    %s74 = sphi 0, %s72
    %s75 = sphi 0, %s74
    %s89 = sphi 0, %s75
    %s93 = sphi 0, %s93
    %s95 = sphi 0, %s93
    %s96 = sphi 0, %s95
    %s110 = sphi 0, %s96
    %s114 = sphi 0, %s114
    %s116 = sphi 0, %s114
    %s117 = sphi 0, %s116
    %s131 = sphi 0, %s117
    %s135 = sphi 0, %s135
    %s137 = sphi 0, %s135
    %s138 = sphi 0, %s137
    %s152 = sphi 0, %s138
    %s156 = sphi 0, %s156
    %s158 = sphi 0, %s156
    %s159 = sphi 0, %s158
    %s173 = sphi 0, %s159
    %s177 = sphi 0, %s177
    %s179 = sphi 0, %s177
    %s180 = sphi 0, %s179
    %s194 = sphi 0, %s180
    %s198 = sphi 0, %s198
    %s200 = sphi 0, %s198
    %s201 = sphi 0, %s200
    %s215 = sphi 0, %s201
    %s219 = sphi 0, %s219
    %s221 = sphi 0, %s219
    %s222 = sphi 0, %s221
    %s236 = sphi 0, %s222
    %s240 = sphi 0, %s240
    %s242 = sphi 0, %s240
    %s243 = sphi 0, %s242
    %s257 = sphi 0, %s243
    %s263 = sphi 0, %s265
    %s266 = sphi 0, %s263
    %s267 = sphi 0, %s266
    %s283 = sphi 0, %s267
  $region4: #{bottleneck3d_ndhwc.1} parent=0 // loop_header_branch
    %20 = sbr.rel (%p18) target = $region8
  $region5: #{bottleneck3d_ndhwc.1} parent=0 // loop_body
    %s22 = ssub.s32 %s17, 1
    %s23 = ssub.s32 %s17, 2
    %s24 = sadd.s32 %s17, 1
    %s25 = ssub.s32 %s17, %s24
    %p26 = scmp.eq.s32.totalorder %s25, 0
    %s28 = sadd.s32 %s27, 1
    %s29 = scalar_select %p26, %s27, %s28
    %p32 = pneg %p26
    %p33 = scmp.eq.s32.totalorder %s17, 1
    %p34 = por %p32, %p33
    %p35 = scmp.ne.s32.totalorder %s27, %s30
    %p36 = scmp.eq.s32.totalorder %s17, 0
    %p37 = por %p35, %p36
    %p38 = scmp.ne.s32.totalorder %s27, %s30
    %p39 = scmp.eq.s32.totalorder %s22, 1
    %p40 = por %p38, %p39
    %p41 = scmp.ne.s32.totalorder %s30, %s31
    %p42 = scmp.eq.s32.totalorder %s22, 0
    %p43 = por %p41, %p42
    %p44 = scmp.ne.s32.totalorder %s30, %s31
    %p45 = scmp.eq.s32.totalorder %s23, 1
    %p46 = por %p44, %p45
    %p48 = scmp.ne.s32.totalorder %s31, %s47
    %p49 = scmp.eq.s32.totalorder %s23, 0
    %p50 = por %p48, %p49
    %s52 = sadd.s32 %s51, 1
    %p55 = scmp.eq.s32.totalorder %s17, 1
    %p56 = scmp.ne.s32.totalorder %s51, %s53
    %p57 = scmp.eq.s32.totalorder %s17, 0
    %p58 = por %p56, %p57
    %p59 = scmp.ne.s32.totalorder %s51, %s53
    %p60 = scmp.eq.s32.totalorder %s22, 1
    %p61 = por %p59, %p60
    %p62 = scmp.ne.s32.totalorder %s53, %s54
    %p63 = scmp.eq.s32.totalorder %s22, 0
    %p64 = por %p62, %p63
    %p65 = scmp.ne.s32.totalorder %s53, %s54
    %p66 = scmp.eq.s32.totalorder %s23, 1
    %p67 = por %p65, %p66
    %p69 = scmp.ne.s32.totalorder %s54, %s68
    %p70 = scmp.eq.s32.totalorder %s23, 0
    %p71 = por %p69, %p70
    %s73 = sadd.s32 %s72, 1
    %p76 = scmp.eq.s32.totalorder %s17, 1
    %p77 = scmp.ne.s32.totalorder %s72, %s74
    %p78 = scmp.eq.s32.totalorder %s17, 0
    %p79 = por %p77, %p78
    %p80 = scmp.ne.s32.totalorder %s72, %s74
    %p81 = scmp.eq.s32.totalorder %s22, 1
    %p82 = por %p80, %p81
    %p83 = scmp.ne.s32.totalorder %s74, %s75
    %p84 = scmp.eq.s32.totalorder %s22, 0
    %p85 = por %p83, %p84
    %p86 = scmp.ne.s32.totalorder %s74, %s75
    %p87 = scmp.eq.s32.totalorder %s23, 1
    %p88 = por %p86, %p87
    %p90 = scmp.ne.s32.totalorder %s75, %s89
    %p91 = scmp.eq.s32.totalorder %s23, 0
    %p92 = por %p90, %p91
    %s94 = sadd.s32 %s93, 1
    %p97 = scmp.eq.s32.totalorder %s17, 1
    %p98 = scmp.ne.s32.totalorder %s93, %s95
    %p99 = scmp.eq.s32.totalorder %s17, 0
    %p100 = por %p98, %p99
    %p101 = scmp.ne.s32.totalorder %s93, %s95
    %p102 = scmp.eq.s32.totalorder %s22, 1
    %p103 = por %p101, %p102
    %p104 = scmp.ne.s32.totalorder %s95, %s96
    %p105 = scmp.eq.s32.totalorder %s22, 0
    %p106 = por %p104, %p105
    %p107 = scmp.ne.s32.totalorder %s95, %s96
    %p108 = scmp.eq.s32.totalorder %s23, 1
    %p109 = por %p107, %p108
    %p111 = scmp.ne.s32.totalorder %s96, %s110
    %p112 = scmp.eq.s32.totalorder %s23, 0
    %p113 = por %p111, %p112
    %s115 = sadd.s32 %s114, 1
    %p118 = scmp.eq.s32.totalorder %s17, 1
    %p119 = scmp.ne.s32.totalorder %s114, %s116
    %p120 = scmp.eq.s32.totalorder %s17, 0
    %p121 = por %p119, %p120
    %p122 = scmp.ne.s32.totalorder %s114, %s116
    %p123 = scmp.eq.s32.totalorder %s22, 1
    %p124 = por %p122, %p123
    %p125 = scmp.ne.s32.totalorder %s116, %s117
    %p126 = scmp.eq.s32.totalorder %s22, 0
    %p127 = por %p125, %p126
    %p128 = scmp.ne.s32.totalorder %s116, %s117
    %p129 = scmp.eq.s32.totalorder %s23, 1
    %p130 = por %p128, %p129
    %p132 = scmp.ne.s32.totalorder %s117, %s131
    %p133 = scmp.eq.s32.totalorder %s23, 0
    %p134 = por %p132, %p133
    %s136 = sadd.s32 %s135, 1
    %p139 = scmp.eq.s32.totalorder %s17, 1
    %p140 = scmp.ne.s32.totalorder %s135, %s137
    %p141 = scmp.eq.s32.totalorder %s17, 0
    %p142 = por %p140, %p141
    %p143 = scmp.ne.s32.totalorder %s135, %s137
    %p144 = scmp.eq.s32.totalorder %s22, 1
    %p145 = por %p143, %p144
    %p146 = scmp.ne.s32.totalorder %s137, %s138
    %p147 = scmp.eq.s32.totalorder %s22, 0
    %p148 = por %p146, %p147
    %p149 = scmp.ne.s32.totalorder %s137, %s138
    %p150 = scmp.eq.s32.totalorder %s23, 1
    %p151 = por %p149, %p150
    %p153 = scmp.ne.s32.totalorder %s138, %s152
    %p154 = scmp.eq.s32.totalorder %s23, 0
    %p155 = por %p153, %p154
    %s157 = sadd.s32 %s156, 1
    %p160 = scmp.eq.s32.totalorder %s17, 1
    %p161 = scmp.ne.s32.totalorder %s156, %s158
    %p162 = scmp.eq.s32.totalorder %s17, 0
    %p163 = por %p161, %p162
    %p164 = scmp.ne.s32.totalorder %s156, %s158
    %p165 = scmp.eq.s32.totalorder %s22, 1
    %p166 = por %p164, %p165
    %p167 = scmp.ne.s32.totalorder %s158, %s159
    %p168 = scmp.eq.s32.totalorder %s22, 0
    %p169 = por %p167, %p168
    %p170 = scmp.ne.s32.totalorder %s158, %s159
    %p171 = scmp.eq.s32.totalorder %s23, 1
    %p172 = por %p170, %p171
    %p174 = scmp.ne.s32.totalorder %s159, %s173
    %p175 = scmp.eq.s32.totalorder %s23, 0
    %p176 = por %p174, %p175
    %s178 = sadd.s32 %s177, 1
    %p181 = scmp.eq.s32.totalorder %s17, 1
    %p182 = scmp.ne.s32.totalorder %s177, %s179
    %p183 = scmp.eq.s32.totalorder %s17, 0
    %p184 = por %p182, %p183
    %p185 = scmp.ne.s32.totalorder %s177, %s179
    %p186 = scmp.eq.s32.totalorder %s22, 1
    %p187 = por %p185, %p186
    %p188 = scmp.ne.s32.totalorder %s179, %s180
    %p189 = scmp.eq.s32.totalorder %s22, 0
    %p190 = por %p188, %p189
    %p191 = scmp.ne.s32.totalorder %s179, %s180
    %p192 = scmp.eq.s32.totalorder %s23, 1
    %p193 = por %p191, %p192
    %p195 = scmp.ne.s32.totalorder %s180, %s194
    %p196 = scmp.eq.s32.totalorder %s23, 0
    %p197 = por %p195, %p196
    %s199 = sadd.s32 %s198, 1
    %p202 = scmp.eq.s32.totalorder %s17, 1
    %p203 = scmp.ne.s32.totalorder %s198, %s200
    %p204 = scmp.eq.s32.totalorder %s17, 0
    %p205 = por %p203, %p204
    %p206 = scmp.ne.s32.totalorder %s198, %s200
    %p207 = scmp.eq.s32.totalorder %s22, 1
    %p208 = por %p206, %p207
    %p209 = scmp.ne.s32.totalorder %s200, %s201
    %p210 = scmp.eq.s32.totalorder %s22, 0
    %p211 = por %p209, %p210
    %p212 = scmp.ne.s32.totalorder %s200, %s201
    %p213 = scmp.eq.s32.totalorder %s23, 1
    %p214 = por %p212, %p213
    %p216 = scmp.ne.s32.totalorder %s201, %s215
    %p217 = scmp.eq.s32.totalorder %s23, 0
    %p218 = por %p216, %p217
    %s220 = sadd.s32 %s219, 1
    %p223 = scmp.eq.s32.totalorder %s17, 1
    %p224 = scmp.ne.s32.totalorder %s219, %s221
    %p225 = scmp.eq.s32.totalorder %s17, 0
    %p226 = por %p224, %p225
    %p227 = scmp.ne.s32.totalorder %s219, %s221
    %p228 = scmp.eq.s32.totalorder %s22, 1
    %p229 = por %p227, %p228
    %p230 = scmp.ne.s32.totalorder %s221, %s222
    %p231 = scmp.eq.s32.totalorder %s22, 0
    %p232 = por %p230, %p231
    %p233 = scmp.ne.s32.totalorder %s221, %s222
    %p234 = scmp.eq.s32.totalorder %s23, 1
    %p235 = por %p233, %p234
    %p237 = scmp.ne.s32.totalorder %s222, %s236
    %p238 = scmp.eq.s32.totalorder %s23, 0
    %p239 = por %p237, %p238
    %s241 = sadd.s32 %s240, 1
    %p244 = scmp.eq.s32.totalorder %s17, 1
    %p245 = scmp.ne.s32.totalorder %s240, %s242
    %p246 = scmp.eq.s32.totalorder %s17, 0
    %p247 = por %p245, %p246
    %p248 = scmp.ne.s32.totalorder %s240, %s242
    %p249 = scmp.eq.s32.totalorder %s22, 1
    %p250 = por %p248, %p249
    %p251 = scmp.ne.s32.totalorder %s242, %s243
    %p252 = scmp.eq.s32.totalorder %s22, 0
    %p253 = por %p251, %p252
    %p254 = scmp.ne.s32.totalorder %s242, %s243
    %p255 = scmp.eq.s32.totalorder %s23, 1
    %p256 = por %p254, %p255
    %p258 = scmp.ne.s32.totalorder %s243, %s257
    %p259 = scmp.eq.s32.totalorder %s23, 0
    %p260 = por %p258, %p259
    %s261 = ssub.s32 %s17, %s24
    %p262 = scmp.eq.s32.totalorder %s261, 0
    %s264 = sadd.s32 %s263, 1
    %s265 = scalar_select %p262, %s263, %s264
    %p268 = pneg %p262
    %p269 = scmp.eq.s32.totalorder %s17, 1
    %p270 = por %p268, %p269
    %p271 = scmp.ne.s32.totalorder %s263, %s266
    %p272 = scmp.eq.s32.totalorder %s17, 0
    %p273 = por %p271, %p272
    %p274 = scmp.ne.s32.totalorder %s263, %s266
    %p275 = scmp.eq.s32.totalorder %s22, 1
    %p276 = por %p274, %p275
    %p277 = scmp.ne.s32.totalorder %s266, %s267
    %p278 = scmp.eq.s32.totalorder %s22, 0
    %p279 = por %p277, %p278
    %p280 = scmp.ne.s32.totalorder %s266, %s267
    %p281 = scmp.eq.s32.totalorder %s23, 1
    %p282 = por %p280, %p281
    %p284 = scmp.ne.s32.totalorder %s267, %s283
    %p285 = scmp.eq.s32.totalorder %s23, 0
    %p286 = por %p284, %p285
    %p287 = scmp.le.s32.totalorder 1, %s17
    %p288 = scmp.lt.s32.totalorder %s17, 3
    %p289 = pnand %p287, %p288
    %p290 = pneg %p289
    // Predicated region
    $region9: #{bottleneck3d_ndhwc.1} parent=5 // pred_check
      _
    $region10: #{bottleneck3d_ndhwc.1} parent=5 // pred_check_branch
      %292 = sbr.rel (%p289) target = $region12
    $region11: #{bottleneck3d_ndhwc.1} parent=5 // pred_region
      %s293 = ssub.s32 %s17, 1
      // Predicated region
      $region13: #{bottleneck3d_ndhwc.1} parent=11 // pred_check
        %p294 = pneg %p64
      $region14: #{bottleneck3d_ndhwc.1} parent=11 // pred_check_branch
        %296 = sbr.rel (%p294) target = $region16
      $region15: #{bottleneck3d_ndhwc.1} parent=11 // pred_region
        _
      $region16: #{bottleneck3d_ndhwc.1} parent=11 // pred_fallthru
        _
      // Predicated region
      $region17: #{bottleneck3d_ndhwc.1} parent=11 // pred_check
        %p297 = pneg %p85
      $region18: #{bottleneck3d_ndhwc.1} parent=11 // pred_check_branch
        %299 = sbr.rel (%p297) target = $region20
      $region19: #{bottleneck3d_ndhwc.1} parent=11 // pred_region
        _
      $region20: #{bottleneck3d_ndhwc.1} parent=11 // pred_fallthru
        _
      // Predicated region
      $region21: #{bottleneck3d_ndhwc.1} parent=11 // pred_check
        %p300 = pneg %p106
      $region22: #{bottleneck3d_ndhwc.1} parent=11 // pred_check_branch
        %302 = sbr.rel (%p300) target = $region24
      $region23: #{bottleneck3d_ndhwc.1} parent=11 // pred_region
        _
      $region24: #{bottleneck3d_ndhwc.1} parent=11 // pred_fallthru
        _
      // Predicated region
      $region25: #{bottleneck3d_ndhwc.1} parent=11 // pred_check
        %p303 = pneg %p127
      $region26: #{bottleneck3d_ndhwc.1} parent=11 // pred_check_branch
        %305 = sbr.rel (%p303) target = $region28
      $region27: #{bottleneck3d_ndhwc.1} parent=11 // pred_region
        _
      $region28: #{bottleneck3d_ndhwc.1} parent=11 // pred_fallthru
        _
      // Predicated region
      $region29: #{bottleneck3d_ndhwc.1} parent=11 // pred_check
        %p306 = pneg %p148
      $region30: #{bottleneck3d_ndhwc.1} parent=11 // pred_check_branch
        %308 = sbr.rel (%p306) target = $region32
      $region31: #{bottleneck3d_ndhwc.1} parent=11 // pred_region
        _
      $region32: #{bottleneck3d_ndhwc.1} parent=11 // pred_fallthru
        _
      // Predicated region
      $region33: #{bottleneck3d_ndhwc.1} parent=11 // pred_check
        %p309 = pneg %p169
      $region34: #{bottleneck3d_ndhwc.1} parent=11 // pred_check_branch
        %311 = sbr.rel (%p309) target = $region36
      $region35: #{bottleneck3d_ndhwc.1} parent=11 // pred_region
        _
      $region36: #{bottleneck3d_ndhwc.1} parent=11 // pred_fallthru
        _
      // Predicated region
      $region37: #{bottleneck3d_ndhwc.1} parent=11 // pred_check
        %p312 = pneg %p190
      $region38: #{bottleneck3d_ndhwc.1} parent=11 // pred_check_branch
        %314 = sbr.rel (%p312) target = $region40
      $region39: #{bottleneck3d_ndhwc.1} parent=11 // pred_region
        _
      $region40: #{bottleneck3d_ndhwc.1} parent=11 // pred_fallthru
        _
      // Predicated region
      $region41: #{bottleneck3d_ndhwc.1} parent=11 // pred_check
        %p315 = pneg %p211
      $region42: #{bottleneck3d_ndhwc.1} parent=11 // pred_check_branch
        %317 = sbr.rel (%p315) target = $region44
      $region43: #{bottleneck3d_ndhwc.1} parent=11 // pred_region
        _
      $region44: #{bottleneck3d_ndhwc.1} parent=11 // pred_fallthru
        _
      // Predicated region
      $region45: #{bottleneck3d_ndhwc.1} parent=11 // pred_check
        %p318 = pneg %p232
      $region46: #{bottleneck3d_ndhwc.1} parent=11 // pred_check_branch
        %320 = sbr.rel (%p318) target = $region48
      $region47: #{bottleneck3d_ndhwc.1} parent=11 // pred_region
        _
      $region48: #{bottleneck3d_ndhwc.1} parent=11 // pred_fallthru
        _
      // Predicated region
      $region49: #{bottleneck3d_ndhwc.1} parent=11 // pred_check
        %p321 = pneg %p253
      $region50: #{bottleneck3d_ndhwc.1} parent=11 // pred_check_branch
        %323 = sbr.rel (%p321) target = $region52
      $region51: #{bottleneck3d_ndhwc.1} parent=11 // pred_region
        _
      $region52: #{bottleneck3d_ndhwc.1} parent=11 // pred_fallthru
        _
    $region12: #{bottleneck3d_ndhwc.1} parent=5 // pred_fallthru
      _
    %p324 = scmp.lt.s32.totalorder %s17, 2
    // Predicated region
    $region53: #{bottleneck3d_ndhwc.1} parent=5 // pred_check
      %p325 = pneg %p324
    $region54: #{bottleneck3d_ndhwc.1} parent=5 // pred_check_branch
      %327 = sbr.rel (%p325) target = $region56
    $region55: #{bottleneck3d_ndhwc.1} parent=5 // pred_region
      // Predicated region
      $region57: #{bottleneck3d_ndhwc.1} parent=55 // pred_check
        %p328 = pneg %p37
      $region58: #{bottleneck3d_ndhwc.1} parent=55 // pred_check_branch
        %330 = sbr.rel (%p328) target = $region60
      $region59: #{bottleneck3d_ndhwc.1} parent=55 // pred_region
        %p331 = scmp.lt.s32.totalorder %s17, 1
        %s332 = scalar_select %p331, %s17, 1
        %s333 = smul.addr %s332, 16
        %s334 = smul.addr %s333, 8
        %s335 = scalar_lea.vmem %s0, %s334
      $region60: #{bottleneck3d_ndhwc.1} parent=55 // pred_fallthru
        _
    $region56: #{bottleneck3d_ndhwc.1} parent=5 // pred_fallthru
      _
    %p336 = scmp.le.s32.totalorder 1, %s17
    %p337 = scmp.lt.s32.totalorder %s17, 3
    %p338 = pnand %p336, %p337
    %p339 = pneg %p338
    // Predicated region
    $region61: #{bottleneck3d_ndhwc.1} parent=5 // pred_check
      _
    $region62: #{bottleneck3d_ndhwc.1} parent=5 // pred_check_branch
      %341 = sbr.rel (%p338) target = $region64
    $region63: #{bottleneck3d_ndhwc.1} parent=5 // pred_region
      %s342 = ssub.s32 %s17, 1
      %p343 = scmp.lt.s32.totalorder %s22, 1
      %s344 = scalar_select %p343, %s22, 1
      %s345 = smul.addr %s344, 16
      %s346 = smul.addr %s345, 8
      %s347 = scalar_lea.vmem %s0, %s346
      %p348 = pneg %p43
      %p349 = pneg %p40
      %p350 = pneg %p64
      %p351 = pneg %p61
      %p352 = pneg %p85
      %p353 = pneg %p82
      %p354 = pneg %p106
      %p355 = pneg %p103
      %p356 = pneg %p127
      %p357 = pneg %p124
      %p358 = pneg %p148
      %p359 = pneg %p145
      %p360 = pneg %p169
      %p361 = pneg %p166
      %p362 = pneg %p190
      %p363 = pneg %p187
      %p364 = pneg %p211
      %p365 = pneg %p208
      %p366 = pneg %p232
      %p367 = pneg %p229
      %p368 = pneg %p253
      %p369 = pneg %p250
      %p370 = pneg %p279
      %p371 = pneg %p276
      %p372 = scmp.lt.s32.totalorder %s22, 1
      %s373 = scalar_select %p372, %s22, 1
      %s374 = smul.addr %s373, 16
      %s375 = smul.addr %s374, 8
      %s376 = scalar_lea.vmem %s11, %s375
      %p377 = scmp.lt.s32.totalorder %s22, 1
      %s378 = scalar_select %p377, %s22, 1
      %s379 = smul.addr %s378, 16
      %s380 = smul.addr %s379, 8
      %s381 = scalar_lea.vmem %s0, %s380
      %p382 = scmp.lt.s32.totalorder %s22, 1
      %s383 = scalar_select %p382, %s22, 1
      %s384 = smul.addr %s383, 16
      %s385 = smul.addr %s384, 8
      %s386 = scalar_lea.vmem %s11, %s385
      %v387 = vld [vmem:[%s381] sm:$0xff]
      %v388 = vld [vmem:[%s381 + $0x8] sm:$0xff]
      %v389 = vld [vmem:[%s381 + $0x10] sm:$0xff]
      %v390 = vld [vmem:[%s381 + $0x18] sm:$0xff]
      %v391 = vld [vmem:[%s381 + $0x20] sm:$0xff]
      %v392 = vld [vmem:[%s381 + $0x28] sm:$0xff]
      %v393 = vld [vmem:[%s381 + $0x30] sm:$0xff]
      %v394 = vld [vmem:[%s381 + $0x38] sm:$0xff]
      %v395 = vld [vmem:[%s381 + $0x40] sm:$0xff]
      %v396 = vld [vmem:[%s381 + $0x48] sm:$0xff]
      %v397 = vld [vmem:[%s381 + $0x50] sm:$0xff]
      %v398 = vld [vmem:[%s381 + $0x58] sm:$0xff]
      %v399 = vld [vmem:[%s381 + $0x60] sm:$0xff]
      %v400 = vld [vmem:[%s381 + $0x68] sm:$0xff]
      %v401 = vld [vmem:[%s381 + $0x70] sm:$0xff]
      %v402 = vld [vmem:[%s381 + $0x78] sm:$0xff]
      %v403 = vld [vmem:[%s2] sm:$0xff]
      %v404 = vld [vmem:[%s2 + $0x8] sm:$0xff]
      %v405 = vld [vmem:[%s2 + $0x10] sm:$0xff]
      %v406 = vld [vmem:[%s2 + $0x18] sm:$0xff]
      %v407 = vld [vmem:[%s2 + $0x20] sm:$0xff]
      %v408 = vld [vmem:[%s2 + $0x28] sm:$0xff]
      %v409 = vld [vmem:[%s2 + $0x30] sm:$0xff]
      %v410 = vld [vmem:[%s2 + $0x38] sm:$0xff]
      %v411 = vld [vmem:[%s2 + $0x40] sm:$0xff]
      %v412 = vld [vmem:[%s2 + $0x48] sm:$0xff]
      %v413 = vld [vmem:[%s2 + $0x50] sm:$0xff]
      %v414 = vld [vmem:[%s2 + $0x58] sm:$0xff]
      %v415 = vld [vmem:[%s2 + $0x60] sm:$0xff]
      %v416 = vld [vmem:[%s2 + $0x68] sm:$0xff]
      %v417 = vld [vmem:[%s2 + $0x70] sm:$0xff]
      %v418 = vld [vmem:[%s2 + $0x78] sm:$0xff]
      %v419 = vld [vmem:[%s1] sm:$0xff]
      %v420 = vld [vmem:[%s1 + $0x8] sm:$0xff]
      %v421 = vld [vmem:[%s1 + $0x10] sm:$0xff]
      %v422 = vld [vmem:[%s1 + $0x18] sm:$0xff]
      %v423 = vld [vmem:[%s1 + $0x20] sm:$0xff]
      %v424 = vld [vmem:[%s1 + $0x28] sm:$0xff]
      %v425 = vld [vmem:[%s1 + $0x30] sm:$0xff]
      %v426 = vld [vmem:[%s1 + $0x38] sm:$0xff]
      %v427 = vld [vmem:[%s1 + $0x40] sm:$0xff]
      %v428 = vld [vmem:[%s1 + $0x48] sm:$0xff]
      %v429 = vld [vmem:[%s1 + $0x50] sm:$0xff]
      %v430 = vld [vmem:[%s1 + $0x58] sm:$0xff]
      %v431 = vld [vmem:[%s1 + $0x60] sm:$0xff]
      %v432 = vld [vmem:[%s1 + $0x68] sm:$0xff]
      %v433 = vld [vmem:[%s1 + $0x70] sm:$0xff]
      %v434 = vld [vmem:[%s1 + $0x78] sm:$0xff]
      %435 = vmatpush.msra.mxu0 %v434
      %436 = vmatpush.msra.mxu0 %v433
      %437 = vmatpush.msra.mxu0 %v432
      %438 = vmatpush.msra.mxu0 %v431
      %439 = vmatpush.msra.mxu0 %v430
      %440 = vmatpush.msra.mxu0 %v429
      %441 = vmatpush.msra.mxu0 %v428
      %442 = vmatpush.msra.mxu0 %v427
      %443 = vmatpush.msra.mxu0 %v426
      %444 = vmatpush.msra.mxu0 %v425
      %445 = vmatpush.msra.mxu0 %v424
      %446 = vmatpush.msra.mxu0 %v423
      %447 = vmatpush.msra.mxu0 %v422
      %448 = vmatpush.msra.mxu0 %v421
      %449 = vmatpush.msra.mxu0 %v420
      %450 = vmatpush.msra.mxu0 %v419
      %451 = vmatmul.f32.gmra.mxu0 0.0
      %v452 = vpop.f32.mrf.mxu0
      %v453 = vadd.f32 0.0, %v452
      %454 = vmatmul.f32.gmra.mxu0 0.0
      %v455 = vpop.f32.mrf.mxu0
      %v456 = vadd.f32 0.0, %v455
      %457 = vmatmul.f32.gmra.mxu0 %v387
      %v458 = vpop.f32.mrf.mxu0
      %v459 = vadd.f32 0.0, %v458
      %460 = vmatmul.f32.gmra.mxu0 %v388
      %v461 = vpop.f32.mrf.mxu0
      %v462 = vadd.f32 0.0, %v461
      %463 = vmatmul.f32.gmra.mxu0 %v389
      %v464 = vpop.f32.mrf.mxu0
      %v465 = vadd.f32 0.0, %v464
      %466 = vmatmul.f32.gmra.mxu0 %v390
      %v467 = vpop.f32.mrf.mxu0
      %v468 = vadd.f32 0.0, %v467
      %469 = vmatmul.f32.gmra.mxu0 %v391
      %v470 = vpop.f32.mrf.mxu0
      %v471 = vadd.f32 0.0, %v470
      %472 = vmatmul.f32.gmra.mxu0 %v392
      %v473 = vpop.f32.mrf.mxu0
      %v474 = vadd.f32 0.0, %v473
      %475 = vmatmul.f32.gmra.mxu0 0.0
      %v476 = vpop.f32.mrf.mxu0
      %v477 = vadd.f32 0.0, %v476
      %478 = vmatmul.f32.gmra.mxu0 0.0
      %v479 = vpop.f32.mrf.mxu0
      %v480 = vadd.f32 0.0, %v479
      %481 = vmatmul.f32.gmra.mxu0 %v395
      %v482 = vpop.f32.mrf.mxu0
      %v483 = vadd.f32 0.0, %v482
      %484 = vmatmul.f32.gmra.mxu0 %v396
      %v485 = vpop.f32.mrf.mxu0
      %v486 = vadd.f32 0.0, %v485
      %487 = vmatmul.f32.gmra.mxu0 %v397
      %v488 = vpop.f32.mrf.mxu0
      %v489 = vadd.f32 0.0, %v488
      %490 = vmatmul.f32.gmra.mxu0 %v398
      %v491 = vpop.f32.mrf.mxu0
      %v492 = vadd.f32 0.0, %v491
      %493 = vmatmul.f32.gmra.mxu0 %v399
      %v494 = vpop.f32.mrf.mxu0
      %v495 = vadd.f32 0.0, %v494
      %496 = vmatmul.f32.gmra.mxu0 %v400
      %v497 = vpop.f32.mrf.mxu0
      %v498 = vadd.f32 0.0, %v497
      %499 = vdwg.mxu0
      %500 = vmatpush.msra.mxu0 %v418
      %501 = vmatpush.msra.mxu0 %v417
      %502 = vmatpush.msra.mxu0 %v416
      %503 = vmatpush.msra.mxu0 %v415
      %504 = vmatpush.msra.mxu0 %v414
      %505 = vmatpush.msra.mxu0 %v413
      %506 = vmatpush.msra.mxu0 %v412
      %507 = vmatpush.msra.mxu0 %v411
      %508 = vmatpush.msra.mxu0 %v410
      %509 = vmatpush.msra.mxu0 %v409
      %510 = vmatpush.msra.mxu0 %v408
      %511 = vmatpush.msra.mxu0 %v407
      %512 = vmatpush.msra.mxu0 %v406
      %513 = vmatpush.msra.mxu0 %v405
      %514 = vmatpush.msra.mxu0 %v404
      %515 = vmatpush.msra.mxu0 %v403
      %516 = vmatmul.f32.gmra.mxu0 %v387
      %v517 = vpop.f32.mrf.mxu0
      %v518 = vadd.f32 %v453, %v517
      %519 = vmatmul.f32.gmra.mxu0 %v388
      %v520 = vpop.f32.mrf.mxu0
      %v521 = vadd.f32 %v456, %v520
      %522 = vmatmul.f32.gmra.mxu0 %v389
      %v523 = vpop.f32.mrf.mxu0
      %v524 = vadd.f32 %v459, %v523
      %525 = vmatmul.f32.gmra.mxu0 %v390
      %v526 = vpop.f32.mrf.mxu0
      %v527 = vadd.f32 %v462, %v526
      %528 = vmatmul.f32.gmra.mxu0 %v391
      %v529 = vpop.f32.mrf.mxu0
      %v530 = vadd.f32 %v465, %v529
      %531 = vmatmul.f32.gmra.mxu0 %v392
      %v532 = vpop.f32.mrf.mxu0
      %v533 = vadd.f32 %v468, %v532
      %534 = vmatmul.f32.gmra.mxu0 %v393
      %v535 = vpop.f32.mrf.mxu0
      %v536 = vadd.f32 %v471, %v535
      %537 = vmatmul.f32.gmra.mxu0 %v394
      %v538 = vpop.f32.mrf.mxu0
      %v539 = vadd.f32 %v474, %v538
      %540 = vmatmul.f32.gmra.mxu0 %v395
      %v541 = vpop.f32.mrf.mxu0
      %v542 = vadd.f32 %v477, %v541
      %543 = vmatmul.f32.gmra.mxu0 %v396
      %v544 = vpop.f32.mrf.mxu0
      %v545 = vadd.f32 %v480, %v544
      %546 = vmatmul.f32.gmra.mxu0 %v397
      %v547 = vpop.f32.mrf.mxu0
      %v548 = vadd.f32 %v483, %v547
      %549 = vmatmul.f32.gmra.mxu0 %v398
      %v550 = vpop.f32.mrf.mxu0
      %v551 = vadd.f32 %v486, %v550
      %552 = vmatmul.f32.gmra.mxu0 %v399
      %v553 = vpop.f32.mrf.mxu0
      %v554 = vadd.f32 %v489, %v553
      %555 = vmatmul.f32.gmra.mxu0 %v400
      %v556 = vpop.f32.mrf.mxu0
      %v557 = vadd.f32 %v492, %v556
      %558 = vmatmul.f32.gmra.mxu0 %v401
      %v559 = vpop.f32.mrf.mxu0
      %v560 = vadd.f32 %v495, %v559
      %561 = vmatmul.f32.gmra.mxu0 %v402
      %v562 = vpop.f32.mrf.mxu0
      %v563 = vadd.f32 %v498, %v562
      %564 = vdwg.mxu0
      %v565 = vld [vmem:[%s3] sm:$0xff]
      %v566 = vld [vmem:[%s3 + $0x8] sm:$0xff]
      %v567 = vld [vmem:[%s3 + $0x10] sm:$0xff]
      %v568 = vld [vmem:[%s3 + $0x18] sm:$0xff]
      %v569 = vld [vmem:[%s3 + $0x20] sm:$0xff]
      %v570 = vld [vmem:[%s3 + $0x28] sm:$0xff]
      %v571 = vld [vmem:[%s3 + $0x30] sm:$0xff]
      %v572 = vld [vmem:[%s3 + $0x38] sm:$0xff]
      %v573 = vld [vmem:[%s3 + $0x40] sm:$0xff]
      %v574 = vld [vmem:[%s3 + $0x48] sm:$0xff]
      %v575 = vld [vmem:[%s3 + $0x50] sm:$0xff]
      %v576 = vld [vmem:[%s3 + $0x58] sm:$0xff]
      %v577 = vld [vmem:[%s3 + $0x60] sm:$0xff]
      %v578 = vld [vmem:[%s3 + $0x68] sm:$0xff]
      %v579 = vld [vmem:[%s3 + $0x70] sm:$0xff]
      %v580 = vld [vmem:[%s3 + $0x78] sm:$0xff]
      %581 = vmatpush.msra.mxu0 %v580
      %582 = vmatpush.msra.mxu0 %v579
      %583 = vmatpush.msra.mxu0 %v578
      %584 = vmatpush.msra.mxu0 %v577
      %585 = vmatpush.msra.mxu0 %v576
      %586 = vmatpush.msra.mxu0 %v575
      %587 = vmatpush.msra.mxu0 %v574
      %588 = vmatpush.msra.mxu0 %v573
      %589 = vmatpush.msra.mxu0 %v572
      %590 = vmatpush.msra.mxu0 %v571
      %591 = vmatpush.msra.mxu0 %v570
      %592 = vmatpush.msra.mxu0 %v569
      %593 = vmatpush.msra.mxu0 %v568
      %594 = vmatpush.msra.mxu0 %v567
      %595 = vmatpush.msra.mxu0 %v566
      %596 = vmatpush.msra.mxu0 %v565
      %597 = vmatmul.f32.gmra.mxu0 %v389
      %v598 = vpop.f32.mrf.mxu0
      %v599 = vadd.f32 0.0, %v598
      %600 = vmatmul.f32.gmra.mxu0 %v390
      %v601 = vpop.f32.mrf.mxu0
      %v602 = vadd.f32 0.0, %v601
      %603 = vmatmul.f32.gmra.mxu0 %v391
      %v604 = vpop.f32.mrf.mxu0
      %v605 = vadd.f32 0.0, %v604
      %606 = vmatmul.f32.gmra.mxu0 %v392
      %v607 = vpop.f32.mrf.mxu0
      %v608 = vadd.f32 0.0, %v607
      %609 = vmatmul.f32.gmra.mxu0 %v393
      %v610 = vpop.f32.mrf.mxu0
      %v611 = vadd.f32 0.0, %v610
      %612 = vmatmul.f32.gmra.mxu0 %v394
      %v613 = vpop.f32.mrf.mxu0
      %v614 = vadd.f32 0.0, %v613
      %615 = vmatmul.f32.gmra.mxu0 0.0
      %v616 = vpop.f32.mrf.mxu0
      %v617 = vadd.f32 0.0, %v616
      %618 = vmatmul.f32.gmra.mxu0 0.0
      %v619 = vpop.f32.mrf.mxu0
      %v620 = vadd.f32 0.0, %v619
      %621 = vmatmul.f32.gmra.mxu0 %v397
      %v622 = vpop.f32.mrf.mxu0
      %v623 = vadd.f32 0.0, %v622
      %624 = vmatmul.f32.gmra.mxu0 %v398
      %v625 = vpop.f32.mrf.mxu0
      %v626 = vadd.f32 0.0, %v625
      %627 = vmatmul.f32.gmra.mxu0 %v399
      %v628 = vpop.f32.mrf.mxu0
      %v629 = vadd.f32 0.0, %v628
      %630 = vmatmul.f32.gmra.mxu0 %v400
      %v631 = vpop.f32.mrf.mxu0
      %v632 = vadd.f32 0.0, %v631
      %633 = vmatmul.f32.gmra.mxu0 %v401
      %v634 = vpop.f32.mrf.mxu0
      %v635 = vadd.f32 0.0, %v634
      %636 = vmatmul.f32.gmra.mxu0 %v402
      %v637 = vpop.f32.mrf.mxu0
      %v638 = vadd.f32 0.0, %v637
      %639 = vmatmul.f32.gmra.mxu0 0.0
      %v640 = vpop.f32.mrf.mxu0
      %v641 = vadd.f32 0.0, %v640
      %642 = vmatmul.f32.gmra.mxu0 0.0
      %v643 = vpop.f32.mrf.mxu0
      %v644 = vadd.f32 0.0, %v643
      %645 = vdwg.mxu0
      %v646 = vadd.f32 %v518, %v599
      %v647 = vadd.f32 %v521, %v602
      %v648 = vadd.f32 %v524, %v605
      %v649 = vadd.f32 %v527, %v608
      %v650 = vadd.f32 %v530, %v611
      %v651 = vadd.f32 %v533, %v614
      %v652 = vadd.f32 %v536, %v617
      %v653 = vadd.f32 %v539, %v620
      %v654 = vadd.f32 %v542, %v623
      %v655 = vadd.f32 %v545, %v626
      %v656 = vadd.f32 %v548, %v629
      %v657 = vadd.f32 %v551, %v632
      %v658 = vadd.f32 %v554, %v635
      %v659 = vadd.f32 %v557, %v638
      %v660 = vadd.f32 %v560, %v641
      %v661 = vadd.f32 %v563, %v644
      %v662 = vld [vmem:[%s4] sm:$0x1]
      %v664 = vperm.slane %v662, 0
      %v666 = vadd.f32 %v646, %v664
      %v667 = vadd.f32 %v647, %v664
      %v668 = vadd.f32 %v648, %v664
      %v669 = vadd.f32 %v649, %v664
      %v670 = vadd.f32 %v650, %v664
      %v671 = vadd.f32 %v651, %v664
      %v672 = vadd.f32 %v652, %v664
      %v673 = vadd.f32 %v653, %v664
      %v674 = vadd.f32 %v654, %v664
      %v675 = vadd.f32 %v655, %v664
      %v676 = vadd.f32 %v656, %v664
      %v677 = vadd.f32 %v657, %v664
      %v678 = vadd.f32 %v658, %v664
      %v679 = vadd.f32 %v659, %v664
      %v680 = vadd.f32 %v660, %v664
      %v681 = vadd.f32 %v661, %v664
      %v682 = vmax.f32 %v666, 0.0
      %v683 = vmax.f32 %v667, 0.0
      %v684 = vmax.f32 %v668, 0.0
      %v685 = vmax.f32 %v669, 0.0
      %v686 = vmax.f32 %v670, 0.0
      %v687 = vmax.f32 %v671, 0.0
      %v688 = vmax.f32 %v672, 0.0
      %v689 = vmax.f32 %v673, 0.0
      %v690 = vmax.f32 %v674, 0.0
      %v691 = vmax.f32 %v675, 0.0
      %v692 = vmax.f32 %v676, 0.0
      %v693 = vmax.f32 %v677, 0.0
      %v694 = vmax.f32 %v678, 0.0
      %v695 = vmax.f32 %v679, 0.0
      %v696 = vmax.f32 %v680, 0.0
      %v697 = vmax.f32 %v681, 0.0
      %vm714 = vcmask 1040384
      %v715 = vrot.slane %v682, 7
      %v716 = vrot.slane %v683, 7
      %v717 = vsel %vm714, %v715, %v716
      %v718 = vrot.slane %v684, 7
      %v719 = vrot.slane %v685, 7
      %v720 = vsel %vm714, %v718, %v719
      %v721 = vrot.slane %v686, 7
      %v722 = vrot.slane %v687, 7
      %v723 = vsel %vm714, %v721, %v722
      %v724 = vrot.slane %v688, 7
      %v725 = vrot.slane %v689, 7
      %v726 = vsel %vm714, %v724, %v725
      %v727 = vrot.slane %v690, 7
      %v728 = vrot.slane %v691, 7
      %v729 = vsel %vm714, %v727, %v728
      %v730 = vrot.slane %v692, 7
      %v731 = vrot.slane %v693, 7
      %v732 = vsel %vm714, %v730, %v731
      %v733 = vrot.slane %v694, 7
      %v734 = vrot.slane %v695, 7
      %v735 = vsel %vm714, %v733, %v734
      %v736 = vrot.slane %v696, 7
      %v737 = vrot.slane %v697, 7
      %v738 = vsel %vm714, %v736, %v737
      %v747 = vsel %vm714, 0.0, %v715
      %v748 = vsel %vm714, 0.0, %v718
      %v749 = vsel %vm714, 0.0, %v721
      %v750 = vsel %vm714, 0.0, %v724
      %v751 = vsel %vm714, 0.0, %v727
      %v752 = vsel %vm714, 0.0, %v730
      %v753 = vsel %vm714, 0.0, %v733
      %v754 = vsel %vm714, 0.0, %v736
      %vm755 = vcmask 1046528
      %v756 = vrot.slane %v682, 1
      %v757 = vrot.slane %v683, 1
      %v758 = vsel %vm755, %v756, %v757
      %v759 = vrot.slane %v684, 1
      %v760 = vrot.slane %v685, 1
      %v761 = vsel %vm755, %v759, %v760
      %v762 = vrot.slane %v686, 1
      %v763 = vrot.slane %v687, 1
      %v764 = vsel %vm755, %v762, %v763
      %v765 = vrot.slane %v688, 1
      %v766 = vrot.slane %v689, 1
      %v767 = vsel %vm755, %v765, %v766
      %v768 = vrot.slane %v690, 1
      %v769 = vrot.slane %v691, 1
      %v770 = vsel %vm755, %v768, %v769
      %v771 = vrot.slane %v692, 1
      %v772 = vrot.slane %v693, 1
      %v773 = vsel %vm755, %v771, %v772
      %v774 = vrot.slane %v694, 1
      %v775 = vrot.slane %v695, 1
      %v776 = vsel %vm755, %v774, %v775
      %v777 = vrot.slane %v696, 1
      %v778 = vrot.slane %v697, 1
      %v779 = vsel %vm755, %v777, %v778
      %v788 = vsel %vm755, %v757, 0.0
      %v789 = vsel %vm755, %v760, 0.0
      %v790 = vsel %vm755, %v763, 0.0
      %v791 = vsel %vm755, %v766, 0.0
      %v792 = vsel %vm755, %v769, 0.0
      %v793 = vsel %vm755, %v772, 0.0
      %v794 = vsel %vm755, %v775, 0.0
      %v795 = vsel %vm755, %v778, 0.0
      %v796 = vld [vmem:[%s6] sm:$0xff]
      %v797 = vld [vmem:[%s6 + $0x8] sm:$0xff]
      %v798 = vld [vmem:[%s6 + $0x10] sm:$0xff]
      %v799 = vld [vmem:[%s6 + $0x18] sm:$0xff]
      %v800 = vld [vmem:[%s5] sm:$0xff]
      %v801 = vld [vmem:[%s5 + $0x8] sm:$0xff]
      %v802 = vld [vmem:[%s5 + $0x10] sm:$0xff]
      %v803 = vld [vmem:[%s5 + $0x18] sm:$0xff]
      %vm804 = vcmask 261120
      %v806 = vsel %vm804, %v747, 0
      %v808 = vsel %vm804, %v717, 0
      %v811 = vsel %vm804, %v748, 0
      %v813 = vsel %vm804, %v720, 0
      %v816 = vsel %vm804, %v749, 0
      %v818 = vsel %vm804, %v723, 0
      %v821 = vsel %vm804, %v750, 0
      %v823 = vsel %vm804, %v726, 0
      %v826 = vsel %vm804, %v751, 0
      %v828 = vsel %vm804, %v729, 0
      %v831 = vsel %vm804, %v752, 0
      %v833 = vsel %vm804, %v732, 0
      %v836 = vsel %vm804, %v753, 0
      %v838 = vsel %vm804, %v735, 0
      %v841 = vsel %vm804, %v754, 0
      %v843 = vsel %vm804, %v738, 0
      %845 = vmatpush.msra.mxu0 0.0
      %846 = vmatpush.msra.mxu0 0.0
      %847 = vmatpush.msra.mxu0 0.0
      %848 = vmatpush.msra.mxu0 0.0
      %849 = vmatpush.msra.mxu0 0.0
      %850 = vmatpush.msra.mxu0 0.0
      %851 = vmatpush.msra.mxu0 0.0
      %852 = vmatpush.msra.mxu0 0.0
      %853 = vmatpush.msra.mxu0 0.0
      %854 = vmatpush.msra.mxu0 0.0
      %855 = vmatpush.msra.mxu0 0.0
      %856 = vmatpush.msra.mxu0 0.0
      %857 = vmatpush.msra.mxu0 %v803
      %858 = vmatpush.msra.mxu0 %v802
      %859 = vmatpush.msra.mxu0 %v801
      %860 = vmatpush.msra.mxu0 %v800
      %861 = vmatmul.f32.gmra.mxu0 %v806
      %v862 = vpop.f32.mrf.mxu0
      %v863 = vadd.f32 0.0, %v862
      %864 = vmatmul.f32.gmra.mxu0 %v808
      %v865 = vpop.f32.mrf.mxu0
      %v866 = vadd.f32 0.0, %v865
      %867 = vmatmul.f32.gmra.mxu0 %v811
      %v868 = vpop.f32.mrf.mxu0
      %v869 = vadd.f32 0.0, %v868
      %870 = vmatmul.f32.gmra.mxu0 %v813
      %v871 = vpop.f32.mrf.mxu0
      %v872 = vadd.f32 0.0, %v871
      %873 = vmatmul.f32.gmra.mxu0 %v816
      %v874 = vpop.f32.mrf.mxu0
      %v875 = vadd.f32 0.0, %v874
      %876 = vmatmul.f32.gmra.mxu0 %v818
      %v877 = vpop.f32.mrf.mxu0
      %v878 = vadd.f32 0.0, %v877
      %879 = vmatmul.f32.gmra.mxu0 %v821
      %v880 = vpop.f32.mrf.mxu0
      %v881 = vadd.f32 0.0, %v880
      %882 = vmatmul.f32.gmra.mxu0 %v823
      %v883 = vpop.f32.mrf.mxu0
      %v884 = vadd.f32 0.0, %v883
      %885 = vmatmul.f32.gmra.mxu0 %v826
      %v886 = vpop.f32.mrf.mxu0
      %v887 = vadd.f32 0.0, %v886
      %888 = vmatmul.f32.gmra.mxu0 %v828
      %v889 = vpop.f32.mrf.mxu0
      %v890 = vadd.f32 0.0, %v889
      %891 = vmatmul.f32.gmra.mxu0 %v831
      %v892 = vpop.f32.mrf.mxu0
      %v893 = vadd.f32 0.0, %v892
      %894 = vmatmul.f32.gmra.mxu0 %v833
      %v895 = vpop.f32.mrf.mxu0
      %v896 = vadd.f32 0.0, %v895
      %897 = vmatmul.f32.gmra.mxu0 %v836
      %v898 = vpop.f32.mrf.mxu0
      %v899 = vadd.f32 0.0, %v898
      %900 = vmatmul.f32.gmra.mxu0 %v838
      %v901 = vpop.f32.mrf.mxu0
      %v902 = vadd.f32 0.0, %v901
      %903 = vmatmul.f32.gmra.mxu0 %v841
      %v904 = vpop.f32.mrf.mxu0
      %v905 = vadd.f32 0.0, %v904
      %906 = vmatmul.f32.gmra.mxu0 %v843
      %v907 = vpop.f32.mrf.mxu0
      %v908 = vadd.f32 0.0, %v907
      %909 = vdwg.mxu0
      %v910 = vsel %vm804, %v682, 0
      %v912 = vsel %vm804, %v683, 0
      %v914 = vsel %vm804, %v684, 0
      %v916 = vsel %vm804, %v685, 0
      %v918 = vsel %vm804, %v686, 0
      %v920 = vsel %vm804, %v687, 0
      %v922 = vsel %vm804, %v688, 0
      %v924 = vsel %vm804, %v689, 0
      %v926 = vsel %vm804, %v690, 0
      %v928 = vsel %vm804, %v691, 0
      %v930 = vsel %vm804, %v692, 0
      %v932 = vsel %vm804, %v693, 0
      %v934 = vsel %vm804, %v694, 0
      %v936 = vsel %vm804, %v695, 0
      %v938 = vsel %vm804, %v696, 0
      %v940 = vsel %vm804, %v697, 0
      %942 = vmatpush.msra.mxu0 0.0
      %943 = vmatpush.msra.mxu0 0.0
      %944 = vmatpush.msra.mxu0 0.0
      %945 = vmatpush.msra.mxu0 0.0
      %946 = vmatpush.msra.mxu0 0.0
      %947 = vmatpush.msra.mxu0 0.0
      %948 = vmatpush.msra.mxu0 0.0
      %949 = vmatpush.msra.mxu0 0.0
      %950 = vmatpush.msra.mxu0 0.0
      %951 = vmatpush.msra.mxu0 0.0
      %952 = vmatpush.msra.mxu0 0.0
      %953 = vmatpush.msra.mxu0 0.0
      %954 = vmatpush.msra.mxu0 %v799
      %955 = vmatpush.msra.mxu0 %v798
      %956 = vmatpush.msra.mxu0 %v797
      %957 = vmatpush.msra.mxu0 %v796
      %958 = vmatmul.f32.gmra.mxu0 %v910
      %v959 = vpop.f32.mrf.mxu0
      %v960 = vadd.f32 %v863, %v959
      %961 = vmatmul.f32.gmra.mxu0 %v912
      %v962 = vpop.f32.mrf.mxu0
      %v963 = vadd.f32 %v866, %v962
      %964 = vmatmul.f32.gmra.mxu0 %v914
      %v965 = vpop.f32.mrf.mxu0
      %v966 = vadd.f32 %v869, %v965
      %967 = vmatmul.f32.gmra.mxu0 %v916
      %v968 = vpop.f32.mrf.mxu0
      %v969 = vadd.f32 %v872, %v968
      %970 = vmatmul.f32.gmra.mxu0 %v918
      %v971 = vpop.f32.mrf.mxu0
      %v972 = vadd.f32 %v875, %v971
      %973 = vmatmul.f32.gmra.mxu0 %v920
      %v974 = vpop.f32.mrf.mxu0
      %v975 = vadd.f32 %v878, %v974
      %976 = vmatmul.f32.gmra.mxu0 %v922
      %v977 = vpop.f32.mrf.mxu0
      %v978 = vadd.f32 %v881, %v977
      %979 = vmatmul.f32.gmra.mxu0 %v924
      %v980 = vpop.f32.mrf.mxu0
      %v981 = vadd.f32 %v884, %v980
      %982 = vmatmul.f32.gmra.mxu0 %v926
      %v983 = vpop.f32.mrf.mxu0
      %v984 = vadd.f32 %v887, %v983
      %985 = vmatmul.f32.gmra.mxu0 %v928
      %v986 = vpop.f32.mrf.mxu0
      %v987 = vadd.f32 %v890, %v986
      %988 = vmatmul.f32.gmra.mxu0 %v930
      %v989 = vpop.f32.mrf.mxu0
      %v990 = vadd.f32 %v893, %v989
      %991 = vmatmul.f32.gmra.mxu0 %v932
      %v992 = vpop.f32.mrf.mxu0
      %v993 = vadd.f32 %v896, %v992
      %994 = vmatmul.f32.gmra.mxu0 %v934
      %v995 = vpop.f32.mrf.mxu0
      %v996 = vadd.f32 %v899, %v995
      %997 = vmatmul.f32.gmra.mxu0 %v936
      %v998 = vpop.f32.mrf.mxu0
      %v999 = vadd.f32 %v902, %v998
      %1000 = vmatmul.f32.gmra.mxu0 %v938
      %v1001 = vpop.f32.mrf.mxu0
      %v1002 = vadd.f32 %v905, %v1001
      %1003 = vmatmul.f32.gmra.mxu0 %v940
      %v1004 = vpop.f32.mrf.mxu0
      %v1005 = vadd.f32 %v908, %v1004
      %1006 = vdwg.mxu0
      %v1007 = vld [vmem:[%s7] sm:$0xff]
      %v1008 = vld [vmem:[%s7 + $0x8] sm:$0xff]
      %v1009 = vld [vmem:[%s7 + $0x10] sm:$0xff]
      %v1010 = vld [vmem:[%s7 + $0x18] sm:$0xff]
      %v1011 = vsel %vm804, %v758, 0
      %v1014 = vsel %vm804, %v788, 0
      %v1016 = vsel %vm804, %v761, 0
      %v1019 = vsel %vm804, %v789, 0
      %v1021 = vsel %vm804, %v764, 0
      %v1024 = vsel %vm804, %v790, 0
      %v1026 = vsel %vm804, %v767, 0
      %v1029 = vsel %vm804, %v791, 0
      %v1031 = vsel %vm804, %v770, 0
      %v1034 = vsel %vm804, %v792, 0
      %v1036 = vsel %vm804, %v773, 0
      %v1039 = vsel %vm804, %v793, 0
      %v1041 = vsel %vm804, %v776, 0
      %v1044 = vsel %vm804, %v794, 0
      %v1046 = vsel %vm804, %v779, 0
      %v1049 = vsel %vm804, %v795, 0
      %1051 = vmatpush.msra.mxu0 0.0
      %1052 = vmatpush.msra.mxu0 0.0
      %1053 = vmatpush.msra.mxu0 0.0
      %1054 = vmatpush.msra.mxu0 0.0
      %1055 = vmatpush.msra.mxu0 0.0
      %1056 = vmatpush.msra.mxu0 0.0
      %1057 = vmatpush.msra.mxu0 0.0
      %1058 = vmatpush.msra.mxu0 0.0
      %1059 = vmatpush.msra.mxu0 0.0
      %1060 = vmatpush.msra.mxu0 0.0
      %1061 = vmatpush.msra.mxu0 0.0
      %1062 = vmatpush.msra.mxu0 0.0
      %1063 = vmatpush.msra.mxu0 %v1010
      %1064 = vmatpush.msra.mxu0 %v1009
      %1065 = vmatpush.msra.mxu0 %v1008
      %1066 = vmatpush.msra.mxu0 %v1007
      %1067 = vmatmul.f32.gmra.mxu0 %v1011
      %v1068 = vpop.f32.mrf.mxu0
      %v1069 = vadd.f32 0.0, %v1068
      %1070 = vmatmul.f32.gmra.mxu0 %v1014
      %v1071 = vpop.f32.mrf.mxu0
      %v1072 = vadd.f32 0.0, %v1071
      %1073 = vmatmul.f32.gmra.mxu0 %v1016
      %v1074 = vpop.f32.mrf.mxu0
      %v1075 = vadd.f32 0.0, %v1074
      %1076 = vmatmul.f32.gmra.mxu0 %v1019
      %v1077 = vpop.f32.mrf.mxu0
      %v1078 = vadd.f32 0.0, %v1077
      %1079 = vmatmul.f32.gmra.mxu0 %v1021
      %v1080 = vpop.f32.mrf.mxu0
      %v1081 = vadd.f32 0.0, %v1080
      %1082 = vmatmul.f32.gmra.mxu0 %v1024
      %v1083 = vpop.f32.mrf.mxu0
      %v1084 = vadd.f32 0.0, %v1083
      %1085 = vmatmul.f32.gmra.mxu0 %v1026
      %v1086 = vpop.f32.mrf.mxu0
      %v1087 = vadd.f32 0.0, %v1086
      %1088 = vmatmul.f32.gmra.mxu0 %v1029
      %v1089 = vpop.f32.mrf.mxu0
      %v1090 = vadd.f32 0.0, %v1089
      %1091 = vmatmul.f32.gmra.mxu0 %v1031
      %v1092 = vpop.f32.mrf.mxu0
      %v1093 = vadd.f32 0.0, %v1092
      %1094 = vmatmul.f32.gmra.mxu0 %v1034
      %v1095 = vpop.f32.mrf.mxu0
      %v1096 = vadd.f32 0.0, %v1095
      %1097 = vmatmul.f32.gmra.mxu0 %v1036
      %v1098 = vpop.f32.mrf.mxu0
      %v1099 = vadd.f32 0.0, %v1098
      %1100 = vmatmul.f32.gmra.mxu0 %v1039
      %v1101 = vpop.f32.mrf.mxu0
      %v1102 = vadd.f32 0.0, %v1101
      %1103 = vmatmul.f32.gmra.mxu0 %v1041
      %v1104 = vpop.f32.mrf.mxu0
      %v1105 = vadd.f32 0.0, %v1104
      %1106 = vmatmul.f32.gmra.mxu0 %v1044
      %v1107 = vpop.f32.mrf.mxu0
      %v1108 = vadd.f32 0.0, %v1107
      %1109 = vmatmul.f32.gmra.mxu0 %v1046
      %v1110 = vpop.f32.mrf.mxu0
      %v1111 = vadd.f32 0.0, %v1110
      %1112 = vmatmul.f32.gmra.mxu0 %v1049
      %v1113 = vpop.f32.mrf.mxu0
      %v1114 = vadd.f32 0.0, %v1113
      %1115 = vdwg.mxu0
      %v1116 = vadd.f32 %v960, %v1069
      %v1117 = vadd.f32 %v963, %v1072
      %v1118 = vadd.f32 %v966, %v1075
      %v1119 = vadd.f32 %v969, %v1078
      %v1120 = vadd.f32 %v972, %v1081
      %v1121 = vadd.f32 %v975, %v1084
      %v1122 = vadd.f32 %v978, %v1087
      %v1123 = vadd.f32 %v981, %v1090
      %v1124 = vadd.f32 %v984, %v1093
      %v1125 = vadd.f32 %v987, %v1096
      %v1126 = vadd.f32 %v990, %v1099
      %v1127 = vadd.f32 %v993, %v1102
      %v1128 = vadd.f32 %v996, %v1105
      %v1129 = vadd.f32 %v999, %v1108
      %v1130 = vadd.f32 %v1002, %v1111
      %v1131 = vadd.f32 %v1005, %v1114
      %v1132 = vld [vmem:[%s8] sm:$0x1]
      %v1134 = vperm.slane %v1132, 0
      %v1136 = vadd.f32 %v1116, %v1134
      %v1137 = vadd.f32 %v1117, %v1134
      %v1138 = vadd.f32 %v1118, %v1134
      %v1139 = vadd.f32 %v1119, %v1134
      %v1140 = vadd.f32 %v1120, %v1134
      %v1141 = vadd.f32 %v1121, %v1134
      %v1142 = vadd.f32 %v1122, %v1134
      %v1143 = vadd.f32 %v1123, %v1134
      %v1144 = vadd.f32 %v1124, %v1134
      %v1145 = vadd.f32 %v1125, %v1134
      %v1146 = vadd.f32 %v1126, %v1134
      %v1147 = vadd.f32 %v1127, %v1134
      %v1148 = vadd.f32 %v1128, %v1134
      %v1149 = vadd.f32 %v1129, %v1134
      %v1150 = vadd.f32 %v1130, %v1134
      %v1151 = vadd.f32 %v1131, %v1134
      %v1152 = vmax.f32 %v1136, 0.0
      %v1153 = vmax.f32 %v1137, 0.0
      %v1154 = vmax.f32 %v1138, 0.0
      %v1155 = vmax.f32 %v1139, 0.0
      %v1156 = vmax.f32 %v1140, 0.0
      %v1157 = vmax.f32 %v1141, 0.0
      %v1158 = vmax.f32 %v1142, 0.0
      %v1159 = vmax.f32 %v1143, 0.0
      %v1160 = vmax.f32 %v1144, 0.0
      %v1161 = vmax.f32 %v1145, 0.0
      %v1162 = vmax.f32 %v1146, 0.0
      %v1163 = vmax.f32 %v1147, 0.0
      %v1164 = vmax.f32 %v1148, 0.0
      %v1165 = vmax.f32 %v1149, 0.0
      %v1166 = vmax.f32 %v1150, 0.0
      %v1167 = vmax.f32 %v1151, 0.0
      %v1168 = vld [vmem:[%s9] sm:$0xff]
      %v1169 = vld [vmem:[%s9 + $0x8] sm:$0xff]
      %v1170 = vld [vmem:[%s9 + $0x10] sm:$0xff]
      %v1171 = vld [vmem:[%s9 + $0x18] sm:$0xff]
      %v1172 = vld [vmem:[%s10] sm:$0x1]
      %v1174 = vperm.slane %v1172, 0
      %v1177 = vsel %vm804, %v1152, 0
      %v1180 = vsel %vm804, %v1153, 0
      %v1183 = vsel %vm804, %v1154, 0
      %v1186 = vsel %vm804, %v1155, 0
      %v1189 = vsel %vm804, %v1156, 0
      %v1192 = vsel %vm804, %v1157, 0
      %v1195 = vsel %vm804, %v1158, 0
      %v1198 = vsel %vm804, %v1159, 0
      %v1201 = vsel %vm804, %v1160, 0
      %v1204 = vsel %vm804, %v1161, 0
      %v1207 = vsel %vm804, %v1162, 0
      %v1210 = vsel %vm804, %v1163, 0
      %v1213 = vsel %vm804, %v1164, 0
      %v1216 = vsel %vm804, %v1165, 0
      %v1219 = vsel %vm804, %v1166, 0
      %v1222 = vsel %vm804, %v1167, 0
      %1224 = vmatpush.msra.mxu0 0.0
      %1225 = vmatpush.msra.mxu0 0.0
      %1226 = vmatpush.msra.mxu0 0.0
      %1227 = vmatpush.msra.mxu0 0.0
      %1228 = vmatpush.msra.mxu0 0.0
      %1229 = vmatpush.msra.mxu0 0.0
      %1230 = vmatpush.msra.mxu0 0.0
      %1231 = vmatpush.msra.mxu0 0.0
      %1232 = vmatpush.msra.mxu0 0.0
      %1233 = vmatpush.msra.mxu0 0.0
      %1234 = vmatpush.msra.mxu0 0.0
      %1235 = vmatpush.msra.mxu0 0.0
      %1236 = vmatpush.msra.mxu0 %v1171
      %1237 = vmatpush.msra.mxu0 %v1170
      %1238 = vmatpush.msra.mxu0 %v1169
      %1239 = vmatpush.msra.mxu0 %v1168
      %1240 = vmatmul.f32.gmra.mxu0 %v1177
      %v1241 = vpop.f32.mrf.mxu0
      %v1242 = vadd.f32 %v1174, %v1241
      %1243 = vmatmul.f32.gmra.mxu0 %v1180
      %v1244 = vpop.f32.mrf.mxu0
      %v1245 = vadd.f32 %v1174, %v1244
      %1246 = vmatmul.f32.gmra.mxu0 %v1183
      %v1247 = vpop.f32.mrf.mxu0
      %v1248 = vadd.f32 %v1174, %v1247
      %1249 = vmatmul.f32.gmra.mxu0 %v1186
      %v1250 = vpop.f32.mrf.mxu0
      %v1251 = vadd.f32 %v1174, %v1250
      %1252 = vmatmul.f32.gmra.mxu0 %v1189
      %v1253 = vpop.f32.mrf.mxu0
      %v1254 = vadd.f32 %v1174, %v1253
      %1255 = vmatmul.f32.gmra.mxu0 %v1192
      %v1256 = vpop.f32.mrf.mxu0
      %v1257 = vadd.f32 %v1174, %v1256
      %1258 = vmatmul.f32.gmra.mxu0 %v1195
      %v1259 = vpop.f32.mrf.mxu0
      %v1260 = vadd.f32 %v1174, %v1259
      %1261 = vmatmul.f32.gmra.mxu0 %v1198
      %v1262 = vpop.f32.mrf.mxu0
      %v1263 = vadd.f32 %v1174, %v1262
      %1264 = vmatmul.f32.gmra.mxu0 %v1201
      %v1265 = vpop.f32.mrf.mxu0
      %v1266 = vadd.f32 %v1174, %v1265
      %1267 = vmatmul.f32.gmra.mxu0 %v1204
      %v1268 = vpop.f32.mrf.mxu0
      %v1269 = vadd.f32 %v1174, %v1268
      %1270 = vmatmul.f32.gmra.mxu0 %v1207
      %v1271 = vpop.f32.mrf.mxu0
      %v1272 = vadd.f32 %v1174, %v1271
      %1273 = vmatmul.f32.gmra.mxu0 %v1210
      %v1274 = vpop.f32.mrf.mxu0
      %v1275 = vadd.f32 %v1174, %v1274
      %1276 = vmatmul.f32.gmra.mxu0 %v1213
      %v1277 = vpop.f32.mrf.mxu0
      %v1278 = vadd.f32 %v1174, %v1277
      %1279 = vmatmul.f32.gmra.mxu0 %v1216
      %v1280 = vpop.f32.mrf.mxu0
      %v1281 = vadd.f32 %v1174, %v1280
      %1282 = vmatmul.f32.gmra.mxu0 %v1219
      %v1283 = vpop.f32.mrf.mxu0
      %v1284 = vadd.f32 %v1174, %v1283
      %1285 = vmatmul.f32.gmra.mxu0 %v1222
      %v1286 = vpop.f32.mrf.mxu0
      %v1287 = vadd.f32 %v1174, %v1286
      %1288 = vdwg.mxu0
      %v1289 = vadd.f32 %v1242, %v387
      %v1290 = vadd.f32 %v1245, %v388
      %v1291 = vadd.f32 %v1248, %v389
      %v1292 = vadd.f32 %v1251, %v390
      %v1293 = vadd.f32 %v1254, %v391
      %v1294 = vadd.f32 %v1257, %v392
      %v1295 = vadd.f32 %v1260, %v393
      %v1296 = vadd.f32 %v1263, %v394
      %v1297 = vadd.f32 %v1266, %v395
      %v1298 = vadd.f32 %v1269, %v396
      %v1299 = vadd.f32 %v1272, %v397
      %v1300 = vadd.f32 %v1275, %v398
      %v1301 = vadd.f32 %v1278, %v399
      %v1302 = vadd.f32 %v1281, %v400
      %v1303 = vadd.f32 %v1284, %v401
      %v1304 = vadd.f32 %v1287, %v402
      %v1305 = vmax.f32 %v1289, 0.0
      %v1306 = vmax.f32 %v1290, 0.0
      %v1307 = vmax.f32 %v1291, 0.0
      %v1308 = vmax.f32 %v1292, 0.0
      %v1309 = vmax.f32 %v1293, 0.0
      %v1310 = vmax.f32 %v1294, 0.0
      %v1311 = vmax.f32 %v1295, 0.0
      %v1312 = vmax.f32 %v1296, 0.0
      %v1313 = vmax.f32 %v1297, 0.0
      %v1314 = vmax.f32 %v1298, 0.0
      %v1315 = vmax.f32 %v1299, 0.0
      %v1316 = vmax.f32 %v1300, 0.0
      %v1317 = vmax.f32 %v1301, 0.0
      %v1318 = vmax.f32 %v1302, 0.0
      %v1319 = vmax.f32 %v1303, 0.0
      %v1320 = vmax.f32 %v1304, 0.0
      %1321 = vst [vmem:[%s386] sm:$0xff] %v1305
      %1322 = vst [vmem:[%s386 + $0x8] sm:$0xff] %v1306
      %1323 = vst [vmem:[%s386 + $0x10] sm:$0xff] %v1307
      %1324 = vst [vmem:[%s386 + $0x18] sm:$0xff] %v1308
      %1325 = vst [vmem:[%s386 + $0x20] sm:$0xff] %v1309
      %1326 = vst [vmem:[%s386 + $0x28] sm:$0xff] %v1310
      %1327 = vst [vmem:[%s386 + $0x30] sm:$0xff] %v1311
      %1328 = vst [vmem:[%s386 + $0x38] sm:$0xff] %v1312
      %1329 = vst [vmem:[%s386 + $0x40] sm:$0xff] %v1313
      %1330 = vst [vmem:[%s386 + $0x48] sm:$0xff] %v1314
      %1331 = vst [vmem:[%s386 + $0x50] sm:$0xff] %v1315
      %1332 = vst [vmem:[%s386 + $0x58] sm:$0xff] %v1316
      %1333 = vst [vmem:[%s386 + $0x60] sm:$0xff] %v1317
      %1334 = vst [vmem:[%s386 + $0x68] sm:$0xff] %v1318
      %1335 = vst [vmem:[%s386 + $0x70] sm:$0xff] %v1319
      %1336 = vst [vmem:[%s386 + $0x78] sm:$0xff] %v1320
      %p1337 = scmp.lt.s32.totalorder %s22, 1
      %s1338 = scalar_select %p1337, %s22, 1
      %s1339 = smul.addr %s1338, 16
      %s1340 = smul.addr %s1339, 8
      %s1341 = scalar_lea.vmem %s11, %s1340
      // Predicated region
      $region65: #{bottleneck3d_ndhwc.1} parent=63 // pred_check
        %p1342 = pneg %p276
      $region66: #{bottleneck3d_ndhwc.1} parent=63 // pred_check_branch
        %1344 = sbr.rel (%p1342) target = $region68
      $region67: #{bottleneck3d_ndhwc.1} parent=63 // pred_region
        _
      $region68: #{bottleneck3d_ndhwc.1} parent=63 // pred_fallthru
        _
    $region64: #{bottleneck3d_ndhwc.1} parent=5 // pred_fallthru
      _
    %p1345 = scmp.le.s32.totalorder 2, %s17
    // Predicated region
    $region69: #{bottleneck3d_ndhwc.1} parent=5 // pred_check
      %p1346 = pneg %p1345
    $region70: #{bottleneck3d_ndhwc.1} parent=5 // pred_check_branch
      %1348 = sbr.rel (%p1346) target = $region72
    $region71: #{bottleneck3d_ndhwc.1} parent=5 // pred_region
      %s1349 = ssub.s32 %s17, 2
      // Predicated region
      $region73: #{bottleneck3d_ndhwc.1} parent=71 // pred_check
        %p1350 = pneg %p282
      $region74: #{bottleneck3d_ndhwc.1} parent=71 // pred_check_branch
        %1352 = sbr.rel (%p1350) target = $region76
      $region75: #{bottleneck3d_ndhwc.1} parent=71 // pred_region
        %p1353 = scmp.lt.s32.totalorder %s23, 1
        %s1354 = scalar_select %p1353, %s23, 1
        %s1355 = smul.addr %s1354, 16
        %s1356 = smul.addr %s1355, 8
        %s1357 = scalar_lea.vmem %s11, %s1356
      $region76: #{bottleneck3d_ndhwc.1} parent=71 // pred_fallthru
        _
    $region72: #{bottleneck3d_ndhwc.1} parent=5 // pred_fallthru
      _
  $region6: #{bottleneck3d_ndhwc.1} parent=0 // loop_footer
    %s21 = sadd.s32 1, %s17
  $region7: #{bottleneck3d_ndhwc.1} parent=0 // loop_footer_branch
    %16 = sbr.rel target = $region3
  $region8: #{bottleneck3d_ndhwc.1} parent=0 // loop_exit
    _

</llo_original>
